<compile_context>
chip_gen: v5e
topology: v5e:2x2
jax: 0.10.0
libtpu: 0.0.40
codegen_flags: <defaults>
</compile_context>

<pallas_src>
import functools

import jax
import jax.numpy as jnp
from jax import lax
from jax.experimental import pallas as pl
from jax.experimental.pallas import tpu as pltpu


def _vq_kernel(z_ref, et_ref, esq_ref, e_ref, out_ref, *, matmul_dtype):
    # z_ref  : (C, THW)   NCHW-native tile of inputs (channels-major)
    # et_ref : (C, K)     codebook, pre-transposed and pre-scaled by -2
    # esq_ref: (1, K)     ||e_k||^2 (f32), precomputed in the wrapper
    # e_ref  : (K, C)     original f32 codebook (for the exact gather)
    # out_ref: (C, THW)   quantized output tile
    z = z_ref[...].T.astype(matmul_dtype)                       # (THW, C) in-VMEM flip (XLU)

    # dist[n,k] = ||e_k||^2 - 2 z_n . e_k   (||z||^2 dropped: argmin-invariant)
    dot = jnp.dot(z, et_ref[...], preferred_element_type=jnp.float32)   # (THW, K) on MXU
    dist = dot + esq_ref[...]                                           # (THW, K)

    thw, k = dist.shape
    row_min = jnp.min(dist, axis=-1, keepdims=True)                     # (THW, 1)
    col = lax.broadcasted_iota(jnp.int32, (thw, k), 1)
    # first-index tie-break (matches torch/jnp argmin) without a variadic argmin reduce
    idx = jnp.min(jnp.where(dist == row_min, col, k), axis=-1, keepdims=True)
    onehot = (col == idx).astype(jnp.float32)                           # (THW, K)

    # exact gather of codebook rows via one-hot matmul (f32 on MXU)
    zq = jnp.dot(onehot, e_ref[...], preferred_element_type=jnp.float32)  # (THW, C)
    out_ref[...] = zq.T.astype(out_ref.dtype)                           # back to (C, THW)


def _choose_tile_hw(hw, max_tile):
    """Lane-align the spatial axis (pad to mult. of 128) and pick a tile that divides it."""
    hwp = ((hw + 127) // 128) * 128
    tile = max(128, (min(max_tile, hwp) // 128) * 128)
    while hwp % tile != 0:
        tile -= 128
    return tile, hwp


def vector_quantizer_ema_forward(z_e, embedding, *, max_tile_hw=1024,
                                 matmul_dtype=jnp.bfloat16):
    """Forward pass of VectorQuantizerEMA.

    z_e:       (B, C, H, W) float32, NCHW (PyTorch convention)
    embedding: (K, C)       float32 codebook
    returns z_q: (B, C, H, W) float32

    max_tile_hw: number of spatial vectors processed per grid step (sweep;
                 512-1024 for v6e/v7x, ~512 on v5e's smaller scoped VMEM).
    matmul_dtype: dtype of the distance matmul inputs (bf16 = MXU-native fast
                  path; use jnp.float32 for bit-faithful torch.cdist argmin).
    """
    b, c, h, w = z_e.shape
    k, d = embedding.shape
    assert c == d, "input channel dim must equal embedding_dim"
    assert c % 8 == 0, "embedding_dim must be a multiple of 8 for TPU tiling"

    hw = h * w
    z3 = z_e.reshape(b, c, hw)                        # NCHW flatten: no data movement
    tile_hw, hwp = _choose_tile_hw(hw, max_tile_hw)
    if hwp != hw:
        z3 = jnp.pad(z3, ((0, 0), (0, 0), (0, hwp - hw)))   # padded cols sliced off below

    # Loop-invariant codebook prep, hoisted out of the kernel:
    e_f32 = embedding.astype(jnp.float32)
    e_t = (-2.0 * e_f32).T.astype(matmul_dtype)       # (C, K), pre-scaled, pre-transposed
    e_sq = jnp.sum(e_f32 * e_f32, axis=1)[None, :]    # (1, K) f32

    grid = (b, hwp // tile_hw)
    out = pl.pallas_call(
        functools.partial(_vq_kernel, matmul_dtype=matmul_dtype),
        out_shape=jax.ShapeDtypeStruct((b, c, hwp), z_e.dtype),
        grid_spec=pltpu.PrefetchScalarGridSpec(
            num_scalar_prefetch=0,
            grid=grid,
            in_specs=[
                pl.BlockSpec((None, c, tile_hw), lambda bi, j: (bi, 0, j)),  # z tile
                pl.BlockSpec((c, k), lambda bi, j: (0, 0)),                  # e_t (resident)
                pl.BlockSpec((1, k), lambda bi, j: (0, 0)),                  # ||e||^2
                pl.BlockSpec((k, c), lambda bi, j: (0, 0)),                  # e (gather)
            ],
            out_specs=pl.BlockSpec((None, c, tile_hw), lambda bi, j: (bi, 0, j)),
        ),
        compiler_params=pltpu.CompilerParams(
            dimension_semantics=("parallel", "parallel"),
            vmem_limit_bytes=32 * 1024 * 1024,
        ),
    )(z3, e_t, e_sq, e_f32)

    if hwp != hw:
        out = out[:, :, :hw]
    return out.reshape(b, c, h, w)


if __name__ == "__main__":
    # Module constants (forward uses only the codebook; ema_cluster_size /
    # ema_w buffers are not touched by forward).
    # TODO(synk): EMA buffer updates & training-time straight-through/commitment
    # terms are outside this module's forward and are not implemented here.
    EMBEDDING_DIM = 128      # LATENT_DIM
    NUM_EMBEDDINGS = 512     # NUM_CODEBOOK_ENTRIES

    key = jax.random.PRNGKey(0)
    k_emb, k_in = jax.random.split(key)
    embedding = jax.random.normal(k_emb, (NUM_EMBEDDINGS, EMBEDDING_DIM), jnp.float32)

    # Small input consistent with the module: C must equal embedding_dim.
    B, C, H, W = 2, EMBEDDING_DIM, 16, 16
    z_e = jax.random.normal(k_in, (B, C, H, W), jnp.float32)

    z_q = vector_quantizer_ema_forward(z_e, embedding)
    z_q = jax.block_until_ready(z_q)
    assert z_q.shape == z_e.shape

    # ---- semantic check (robust to the bf16 distance fast path) ----------------
    z_flat = jnp.transpose(z_e, (0, 2, 3, 1)).reshape(-1, C)
    zq_flat = jnp.transpose(z_q, (0, 2, 3, 1)).reshape(-1, C)
    e = embedding

    # true f32 squared distances to every codeword
    d_all = jnp.sum((z_flat[:, None, :] - e[None, :, :]) ** 2, axis=-1)    # (N, K)
    idx_ref = jnp.argmin(d_all, axis=1)
    d_opt = jnp.min(d_all, axis=1)

    # which codeword did the kernel pick?  every output row must be a codebook row.
    d_q = jnp.sum((zq_flat[:, None, :] - e[None, :, :]) ** 2, axis=-1)
    idx_sel = jnp.argmin(d_q, axis=1)
    assert float(jnp.max(jnp.abs(zq_flat - e[idx_sel]))) < 1e-5, \
        "kernel output rows are not codebook rows"

    # the picked codeword must be (near-)optimal in true f32 distance; the small
    # slack covers argmin flips on near-ties introduced by the bf16 matmul.
    d_sel = jnp.take_along_axis(d_all, idx_sel[:, None], axis=1)[:, 0]
    assert bool(jnp.all(d_sel <= d_opt * 1.05 + 1e-3)), \
        "kernel picked a non-nearest codeword"
    # essentially all indices should match the exact-f32 reference argmin
    assert float(jnp.mean((idx_sel == idx_ref).astype(jnp.float32))) > 0.9

    print("KERNEL_OK")
</pallas_src>

<mosaic_0001>
module attributes {stable_mosaic.version = 11 : i64} {
  func.func @_vq_kernel(%arg0: i32, %arg1: i32, %arg2: memref<1x128x256xf32, #tpu.memory_space<vmem>>, %arg3: memref<128x512xbf16, #tpu.memory_space<vmem>>, %arg4: memref<1x512xf32, #tpu.memory_space<vmem>>, %arg5: memref<512x128xf32, #tpu.memory_space<vmem>>, %arg6: memref<1x128x256xf32, #tpu.memory_space<vmem>>) attributes {dimension_semantics = [#tpu.dimension_semantics<parallel>, #tpu.dimension_semantics<parallel>], iteration_bounds = array<i64: 2, 1>, scalar_prefetch = 0 : i64, scratch_operands = 0 : i64, tpu.core_type = #tpu.core_type<tc>, window_params = [{transform_indices = @transform_0, window_bounds = array<i64: 1, 128, 256>}, {pipeline_mode = #tpu.pipeline_mode<synchronous>, transform_indices = @transform_1, window_bounds = array<i64: 128, 512>}, {pipeline_mode = #tpu.pipeline_mode<synchronous>, transform_indices = @transform_2, window_bounds = array<i64: 1, 512>}, {pipeline_mode = #tpu.pipeline_mode<synchronous>, transform_indices = @transform_3, window_bounds = array<i64: 512, 128>}, {transform_indices = @transform_4, window_bounds = array<i64: 1, 128, 256>}]} {
    %c0 = arith.constant 0 : index
    %c0_0 = arith.constant 0 : index
    %c0_1 = arith.constant 0 : index
    %0 = vector.load %arg2[%c0, %c0_0, %c0_1] : memref<1x128x256xf32, #tpu.memory_space<vmem>>, vector<1x128x256xf32>
    %1 = vector.shape_cast %0 : vector<1x128x256xf32> to vector<128x256xf32>
    %2 = tpu.transpose %1, [1, 0] : vector<128x256xf32> -> vector<256x128xf32>
    %3 = arith.truncf %2 : vector<256x128xf32> to vector<256x128xbf16>
    %c0_2 = arith.constant 0 : index
    %c0_3 = arith.constant 0 : index
    %4 = vector.load %arg3[%c0_2, %c0_3] : memref<128x512xbf16, #tpu.memory_space<vmem>>, vector<128x512xbf16>
    %cst = arith.constant dense<0.000000e+00> : vector<256x512xf32>
    %5 = tpu.matmul %3, %4, %cst {dimension_numbers = #tpu.dot_dimension_numbers<[1], [0], [0], [1], [0, 0, 1, 1], [], []>} : vector<256x128xbf16>, vector<128x512xbf16>, vector<256x512xf32> -> vector<256x512xf32>
    %c0_4 = arith.constant 0 : index
    %c0_5 = arith.constant 0 : index
    %6 = vector.load %arg4[%c0_4, %c0_5] : memref<1x512xf32, #tpu.memory_space<vmem>>, vector<1x512xf32>
    %7 = vector.broadcast %6 : vector<1x512xf32> to vector<256x512xf32>
    %8 = arith.addf %5, %7 : vector<256x512xf32>
    %cst_6 = arith.constant dense<0x7F800000> : vector<256xf32>
    %9 = vector.multi_reduction <minimumf>, %8, %cst_6 [1] : vector<256x512xf32> to vector<256xf32>
    %10 = vector.shape_cast %9 : vector<256xf32> to vector<256x1xf32>
    %11 = tpu.iota {dimensions = array<i32: 1>} : vector<256x512xi32>
    %12 = vector.broadcast %10 : vector<256x1xf32> to vector<256x512xf32>
    %13 = arith.cmpf oeq, %8, %12 : vector<256x512xf32>
    %c512_i32 = arith.constant 512 : i32
    %14 = vector.broadcast %c512_i32 : i32 to vector<256x512xi32>
    %15 = arith.select %13, %11, %14 : vector<256x512xi1>, vector<256x512xi32>
    %cst_7 = arith.constant dense<2147483647> : vector<256xi32>
    %16 = vector.multi_reduction <minsi>, %15, %cst_7 [1] : vector<256x512xi32> to vector<256xi32>
    %17 = vector.shape_cast %16 : vector<256xi32> to vector<256x1xi32>
    %18 = vector.broadcast %17 : vector<256x1xi32> to vector<256x512xi32>
    %19 = arith.cmpi eq, %11, %18 : vector<256x512xi32>
    %20 = arith.extui %19 : vector<256x512xi1> to vector<256x512xi32>
    %21 = arith.sitofp %20 : vector<256x512xi32> to vector<256x512xf32>
    %c0_8 = arith.constant 0 : index
    %c0_9 = arith.constant 0 : index
    %22 = vector.load %arg5[%c0_8, %c0_9] : memref<512x128xf32, #tpu.memory_space<vmem>>, vector<512x128xf32>
    %cst_10 = arith.constant dense<0.000000e+00> : vector<256x128xf32>
    %23 = tpu.matmul %21, %22, %cst_10 {dimension_numbers = #tpu.dot_dimension_numbers<[1], [0], [0], [1], [0, 0, 1, 1], [], []>} : vector<256x512xf32>, vector<512x128xf32>, vector<256x128xf32> -> vector<256x128xf32>
    %24 = tpu.transpose %23, [1, 0] : vector<256x128xf32> -> vector<128x256xf32>
    %c0_11 = arith.constant 0 : index
    %c0_12 = arith.constant 0 : index
    %c0_13 = arith.constant 0 : index
    %25 = vector.load %arg6[%c0_11, %c0_12, %c0_13] : memref<1x128x256xf32, #tpu.memory_space<vmem>>, vector<1x128x256xf32>
    %26 = vector.shape_cast %25 : vector<1x128x256xf32> to vector<128x256xf32>
    %27 = vector.shape_cast %24 : vector<128x256xf32> to vector<1x128x256xf32>
    tpu.vector_store %arg6[%c0_11, %c0_12, %c0_13], %27 {strides = array<i32>} : memref<1x128x256xf32, #tpu.memory_space<vmem>>, vector<1x128x256xf32>,
    return
  }
  func.func @transform_0(%arg0: i32, %arg1: i32) -> (i32, i32, i32) {
    %c0_i32 = arith.constant 0 : i32
    %c0_i32_0 = arith.constant 0 : i32
    return %arg0, %c0_i32, %arg1 : i32, i32, i32
  }
  func.func @transform_1(%arg0: i32, %arg1: i32) -> (i32, i32) {
    %c0_i32 = arith.constant 0 : i32
    %c0_i32_0 = arith.constant 0 : i32
    %c0_i32_1 = arith.constant 0 : i32
    return %c0_i32, %c0_i32_0 : i32, i32
  }
  func.func @transform_2(%arg0: i32, %arg1: i32) -> (i32, i32) {
    %c0_i32 = arith.constant 0 : i32
    %c0_i32_0 = arith.constant 0 : i32
    %c0_i32_1 = arith.constant 0 : i32
    return %c0_i32, %c0_i32_0 : i32, i32
  }
  func.func @transform_3(%arg0: i32, %arg1: i32) -> (i32, i32) {
    %c0_i32 = arith.constant 0 : i32
    %c0_i32_0 = arith.constant 0 : i32
    %c0_i32_1 = arith.constant 0 : i32
    return %c0_i32, %c0_i32_0 : i32, i32
  }
  func.func @transform_4(%arg0: i32, %arg1: i32) -> (i32, i32, i32) {
    %c0_i32 = arith.constant 0 : i32
    %c0_i32_0 = arith.constant 0 : i32
    return %arg0, %c0_i32, %arg1 : i32, i32, i32
  }
}

</mosaic_0001>

<llo_original>
// kernel: tpu_custom_call.1
$region0: #{tpu_custom_call.1}
  #allocation0 [shape = 'u32[]', space=smem, size = 0x4, offset = 0x4, fixed_abs, tag = 'smem constant byte address 0x4 - core index']
  #allocation1 [shape = 'u32[72,128]{1,0:T(1,128)}', space=vmem, size = 0x9000, scoped, tag = 'internal scratch']
  %s0 = inlined_call_operand.hbm [shape: f32[2,128,256], index: 0, kind: input, shape index: {}]
  %s1 = inlined_call_operand.hbm [shape: bf16[128,512], index: 1, kind: input, shape index: {}]
  %s2 = inlined_call_operand.hbm [shape: f32[1,512], index: 2, kind: input, shape index: {}]
  %s3 = inlined_call_operand.hbm [shape: f32[512,128], index: 3, kind: input, shape index: {}]
  %s4 = inlined_call_operand.hbm [shape: f32[2,128,256], index: 4, kind: output, shape index: {}]
  %s5 = sld [smem:[#allocation0]]
  $region65: #{tpu_custom_call.1} parent=0
    _
  %s7 = ssub.s32 1, %s5
  %s8 = scalar_select 0, %s7, %s5
  $region1: #{tpu_custom_call.1} parent=0
    #allocation2 [shape = 'u8[262144]{0}', space=vmem, size = 0x40000, scoped, tag = 'input window, operand 0']
    #allocation3 [shape = 's32[2]{0}', space=sflag, size = 0x8, scoped, tag = 'scoped memory for tpu_custom_call.1']
    #allocation4 [shape = 's32[2]{0}', space=sflag, size = 0x8, scoped, tag = 'scoped memory for tpu_custom_call.1']
    #allocation5 [shape = 'u8[131072]{0}', space=vmem, size = 0x20000, scoped, tag = 'input window, operand 1, single buffered']
    #allocation6 [shape = 's32[1]{0}', space=sflag, size = 0x4, scoped, tag = 'scoped memory for tpu_custom_call.1']
    #allocation7 [shape = 'u8[2048]{0}', space=vmem, size = 0x800, scoped, tag = 'input window, operand 2, single buffered']
    #allocation8 [shape = 'u8[262144]{0}', space=vmem, size = 0x40000, scoped, tag = 'input window, operand 3, single buffered']
    #allocation9 [shape = 's32[1]{0}', space=sflag, size = 0x4, scoped, tag = 'scoped memory for tpu_custom_call.1']
    #allocation10 [shape = 'u8[262144]{0}', space=vmem, size = 0x40000, scoped, tag = 'output window, operand 0']
    %9 = vsyncpa [#allocation3], 0
    %s10 = scalar_lea.sflag [#allocation3], 1
    %11 = vsyncpa %s10, 0
    %12 = vsyncpa [#allocation6], 0
    %13 = vsyncpa [#allocation9], 0
    %14 = vsyncpa [#allocation4], 0
    %s15 = scalar_lea.sflag [#allocation4], 1
    %16 = vsyncpa %s15, 0
    loop: start=0, step=1, limit=4
    $region2: #{tpu_custom_call.1} parent=1 // loop_pre_header
      _
    $region3: #{tpu_custom_call.1} parent=1 // loop_header
      %s18 = sphi 0, %s22
      %p19 = scmp.ge.s32.totalorder %s18, 4
      %s25 = sphi 0, %s37
      %s26 = sphi 0, %s33
      %s27 = sphi 0, %s25
      %s28 = sphi 0, %s26
      %s29 = sphi 0, %s27
      %s30 = sphi 0, %s28
      %s42 = sphi 0, %s44
      %s45 = sphi 0, %s42
      %s46 = sphi 0, %s45
      %s62 = sphi 0, %s46
      %s66 = sphi 0, %s66
      %s68 = sphi 0, %s66
      %s69 = sphi 0, %s68
      %s83 = sphi 0, %s69
      %s87 = sphi 0, %s87
      %s89 = sphi 0, %s87
      %s90 = sphi 0, %s89
      %s104 = sphi 0, %s90
      %s108 = sphi 0, %s108
      %s110 = sphi 0, %s108
      %s111 = sphi 0, %s110
      %s125 = sphi 0, %s111
      %s133 = sphi 0, %s135
      %s136 = sphi 0, %s133
      %s137 = sphi 0, %s136
      %s153 = sphi 0, %s137
    $region4: #{tpu_custom_call.1} parent=1 // loop_header_branch
      %21 = sbr.rel (%p19) target = $region8
    $region5: #{tpu_custom_call.1} parent=1 // loop_body
      %s23 = ssub.s32 %s18, 1
      %s24 = ssub.s32 %s18, 2
      %s31 = sadd.s32 1, %s26
      %p32 = scmp.ge.s32.totalorder %s31, 1
      %s33 = scalar_select %p32, 0, %s31
      %s34 = sadd.s32 1, %s25
      %s35 = scalar_select %p32, %s34, %s25
      %p36 = scmp.ge.s32.totalorder %s35, 2
      %s37 = scalar_select %p36, 0, %s35
      %s38 = ssub.s32 %s25, %s37
      %s39 = ssub.s32 %s26, %s33
      %s40 = sor.u32 %s38, %s39
      %p41 = scmp.eq.s32.totalorder %s40, 0
      %s43 = sadd.s32 %s42, 1
      %s44 = scalar_select %p41, %s42, %s43
      %p47 = pneg %p41
      %p48 = scmp.eq.s32.totalorder %s18, 1
      %p49 = por %p47, %p48
      %p50 = scmp.ne.s32.totalorder %s42, %s45
      %p51 = scmp.eq.s32.totalorder %s18, 0
      %p52 = por %p50, %p51
      %p53 = scmp.ne.s32.totalorder %s42, %s45
      %p54 = scmp.eq.s32.totalorder %s23, 1
      %p55 = por %p53, %p54
      %p56 = scmp.ne.s32.totalorder %s45, %s46
      %p57 = scmp.eq.s32.totalorder %s23, 0
      %p58 = por %p56, %p57
      %p59 = scmp.ne.s32.totalorder %s45, %s46
      %p60 = scmp.eq.s32.totalorder %s24, 1
      %p61 = por %p59, %p60
      %p63 = scmp.ne.s32.totalorder %s46, %s62
      %p64 = scmp.eq.s32.totalorder %s24, 0
      %p65 = por %p63, %p64
      %s67 = sadd.s32 %s66, 1
      %p70 = scmp.eq.s32.totalorder %s18, 1
      %p71 = scmp.ne.s32.totalorder %s66, %s68
      %p72 = scmp.eq.s32.totalorder %s18, 0
      %p73 = por %p71, %p72
      %p74 = scmp.ne.s32.totalorder %s66, %s68
      %p75 = scmp.eq.s32.totalorder %s23, 1
      %p76 = por %p74, %p75
      %p77 = scmp.ne.s32.totalorder %s68, %s69
      %p78 = scmp.eq.s32.totalorder %s23, 0
      %p79 = por %p77, %p78
      %p80 = scmp.ne.s32.totalorder %s68, %s69
      %p81 = scmp.eq.s32.totalorder %s24, 1
      %p82 = por %p80, %p81
      %p84 = scmp.ne.s32.totalorder %s69, %s83
      %p85 = scmp.eq.s32.totalorder %s24, 0
      %p86 = por %p84, %p85
      %s88 = sadd.s32 %s87, 1
      %p91 = scmp.eq.s32.totalorder %s18, 1
      %p92 = scmp.ne.s32.totalorder %s87, %s89
      %p93 = scmp.eq.s32.totalorder %s18, 0
      %p94 = por %p92, %p93
      %p95 = scmp.ne.s32.totalorder %s87, %s89
      %p96 = scmp.eq.s32.totalorder %s23, 1
      %p97 = por %p95, %p96
      %p98 = scmp.ne.s32.totalorder %s89, %s90
      %p99 = scmp.eq.s32.totalorder %s23, 0
      %p100 = por %p98, %p99
      %p101 = scmp.ne.s32.totalorder %s89, %s90
      %p102 = scmp.eq.s32.totalorder %s24, 1
      %p103 = por %p101, %p102
      %p105 = scmp.ne.s32.totalorder %s90, %s104
      %p106 = scmp.eq.s32.totalorder %s24, 0
      %p107 = por %p105, %p106
      %s109 = sadd.s32 %s108, 1
      %p112 = scmp.eq.s32.totalorder %s18, 1
      %p113 = scmp.ne.s32.totalorder %s108, %s110
      %p114 = scmp.eq.s32.totalorder %s18, 0
      %p115 = por %p113, %p114
      %p116 = scmp.ne.s32.totalorder %s108, %s110
      %p117 = scmp.eq.s32.totalorder %s23, 1
      %p118 = por %p116, %p117
      %p119 = scmp.ne.s32.totalorder %s110, %s111
      %p120 = scmp.eq.s32.totalorder %s23, 0
      %p121 = por %p119, %p120
      %p122 = scmp.ne.s32.totalorder %s110, %s111
      %p123 = scmp.eq.s32.totalorder %s24, 1
      %p124 = por %p122, %p123
      %p126 = scmp.ne.s32.totalorder %s111, %s125
      %p127 = scmp.eq.s32.totalorder %s24, 0
      %p128 = por %p126, %p127
      %s129 = ssub.s32 %s25, %s37
      %s130 = ssub.s32 %s26, %s33
      %s131 = sor.u32 %s129, %s130
      %p132 = scmp.eq.s32.totalorder %s131, 0
      %s134 = sadd.s32 %s133, 1
      %s135 = scalar_select %p132, %s133, %s134
      %p138 = pneg %p132
      %p139 = scmp.eq.s32.totalorder %s18, 1
      %p140 = por %p138, %p139
      %p141 = scmp.ne.s32.totalorder %s133, %s136
      %p142 = scmp.eq.s32.totalorder %s18, 0
      %p143 = por %p141, %p142
      %p144 = scmp.ne.s32.totalorder %s133, %s136
      %p145 = scmp.eq.s32.totalorder %s23, 1
      %p146 = por %p144, %p145
      %p147 = scmp.ne.s32.totalorder %s136, %s137
      %p148 = scmp.eq.s32.totalorder %s23, 0
      %p149 = por %p147, %p148
      %p150 = scmp.ne.s32.totalorder %s136, %s137
      %p151 = scmp.eq.s32.totalorder %s24, 1
      %p152 = por %p150, %p151
      %p154 = scmp.ne.s32.totalorder %s137, %s153
      %p155 = scmp.eq.s32.totalorder %s24, 0
      %p156 = por %p154, %p155
      %p157 = scmp.le.s32.totalorder 1, %s18
      %p158 = scmp.lt.s32.totalorder %s18, 3
      %p159 = pnand %p157, %p158
      %p160 = pneg %p159
      // Predicated region
      $region9: #{tpu_custom_call.1} parent=5 // pred_check
        _
      $region10: #{tpu_custom_call.1} parent=5 // pred_check_branch
        %162 = sbr.rel (%p159) target = $region12
      $region11: #{tpu_custom_call.1} parent=5 // pred_region
        %s163 = ssub.s32 %s18, 1
        // Predicated region
        $region13: #{tpu_custom_call.1} parent=11 // pred_check
          %p164 = pneg %p79
        $region14: #{tpu_custom_call.1} parent=11 // pred_check_branch
          %166 = sbr.rel (%p164) target = $region16
        $region15: #{tpu_custom_call.1} parent=11 // pred_region
          %168 = vsyncadd [#allocation6], 0
          %s169 = sshll.u32 %s1, 4
          %s170 = int_to_ptr.hbm [resolvable:$true] %s169
          %s171 = sshll.u32 [#allocation5], 4
          %s172 = int_to_ptr.vmem [resolvable:$true] %s171
          %177 = dma.hbm_to_vmem [thread:$0]  %s170, 4096, %s172, [#allocation6], 256, 256, 16
        $region16: #{tpu_custom_call.1} parent=11 // pred_fallthru
          _
        // Predicated region
        $region17: #{tpu_custom_call.1} parent=11 // pred_check
          %p178 = pneg %p100
        $region18: #{tpu_custom_call.1} parent=11 // pred_check_branch
          %180 = sbr.rel (%p178) target = $region20
        $region19: #{tpu_custom_call.1} parent=11 // pred_region
          %182 = vsyncadd [#allocation6], 0
          %s184 = sshll.u32 %s2, 4
          %s185 = int_to_ptr.hbm [resolvable:$true] %s184
          %s186 = sshll.u32 [#allocation7], 4
          %s187 = int_to_ptr.vmem [resolvable:$true] %s186
          %189 = dma.hbm_to_vmem [thread:$0]  %s185, 64, %s187, [#allocation6]
        $region20: #{tpu_custom_call.1} parent=11 // pred_fallthru
          _
        // Predicated region
        $region21: #{tpu_custom_call.1} parent=11 // pred_check
          %p190 = pneg %p121
        $region22: #{tpu_custom_call.1} parent=11 // pred_check_branch
          %192 = sbr.rel (%p190) target = $region24
        $region23: #{tpu_custom_call.1} parent=11 // pred_region
          %194 = vsyncadd [#allocation9], 0
          %s195 = sshll.u32 %s3, 4
          %s196 = int_to_ptr.hbm [resolvable:$true] %s195
          %s197 = sshll.u32 [#allocation8], 4
          %s198 = int_to_ptr.vmem [resolvable:$true] %s197
          %203 = dma.hbm_to_vmem [thread:$0]  %s196, 8192, %s198, [#allocation9], 128, 128, 8
        $region24: #{tpu_custom_call.1} parent=11 // pred_fallthru
          _
      $region12: #{tpu_custom_call.1} parent=5 // pred_fallthru
        _
      %p204 = scmp.lt.s32.totalorder %s18, 2
      // Predicated region
      $region25: #{tpu_custom_call.1} parent=5 // pred_check
        %p205 = pneg %p204
      $region26: #{tpu_custom_call.1} parent=5 // pred_check_branch
        %207 = sbr.rel (%p205) target = $region28
      $region27: #{tpu_custom_call.1} parent=5 // pred_region
        // Predicated region
        $region29: #{tpu_custom_call.1} parent=27 // pred_check
          %p208 = pneg %p52
        $region30: #{tpu_custom_call.1} parent=27 // pred_check_branch
          %210 = sbr.rel (%p208) target = $region32
        $region31: #{tpu_custom_call.1} parent=27 // pred_region
          %s211 = sand.u32 %s42, 1
          %s212 = scalar_lea.sflag [#allocation3], %s211
          %s213 = sand.u32 %s42, 1
          %s214 = smul.addr %s213, 256
          %s215 = scalar_lea.vmem [#allocation2], %s214
          %s216 = smul.u32 2, %s26
          %218 = vsyncadd %s212, 0
          %s219 = smul.addr %s25, 32
          %s220 = sadd.s32 %s216, %s219
          %s221 = smul.addr %s220, 8
          %s222 = scalar_lea.hbm %s0, %s221
          %s223 = sshll.u32 %s222, 4
          %s224 = int_to_ptr.hbm [resolvable:$true] %s223
          %s225 = sshll.u32 %s215, 4
          %s226 = int_to_ptr.vmem [resolvable:$true] %s225
          %231 = dma.hbm_to_vmem [thread:$0]  %s224, 4096, %s226, %s212, 256, 256, 16
        $region32: #{tpu_custom_call.1} parent=27 // pred_fallthru
          _
      $region28: #{tpu_custom_call.1} parent=5 // pred_fallthru
        _
      %p232 = scmp.le.s32.totalorder 1, %s18
      %p233 = scmp.lt.s32.totalorder %s18, 3
      %p234 = pnand %p232, %p233
      %p235 = pneg %p234
      // Predicated region
      $region33: #{tpu_custom_call.1} parent=5 // pred_check
        _
      $region34: #{tpu_custom_call.1} parent=5 // pred_check_branch
        %237 = sbr.rel (%p234) target = $region36
      $region35: #{tpu_custom_call.1} parent=5 // pred_region
        %s238 = ssub.s32 %s18, 1
        %s239 = sand.u32 %s45, 1
        %s240 = scalar_lea.sflag [#allocation3], %s239
        %s241 = sand.u32 %s45, 1
        %s242 = smul.addr %s241, 256
        %s243 = scalar_lea.vmem [#allocation2], %s242
        // Predicated region
        $region37: #{tpu_custom_call.1} parent=35 // pred_check
          %p244 = pneg %p58
        $region38: #{tpu_custom_call.1} parent=35 // pred_check_branch
          %246 = sbr.rel (%p244) target = $region40
        $region39: #{tpu_custom_call.1} parent=35 // pred_region
          %248 = dma.done %s240, 4096
        $region40: #{tpu_custom_call.1} parent=35 // pred_fallthru
          _
        // Predicated region
        $region41: #{tpu_custom_call.1} parent=35 // pred_check
          %p249 = pneg %p79
        $region42: #{tpu_custom_call.1} parent=35 // pred_check_branch
          %251 = sbr.rel (%p249) target = $region44
        $region43: #{tpu_custom_call.1} parent=35 // pred_region
          %253 = dma.done [#allocation6], 4096
        $region44: #{tpu_custom_call.1} parent=35 // pred_fallthru
          _
        // Predicated region
        $region45: #{tpu_custom_call.1} parent=35 // pred_check
          %p254 = pneg %p100
        $region46: #{tpu_custom_call.1} parent=35 // pred_check_branch
          %256 = sbr.rel (%p254) target = $region48
        $region47: #{tpu_custom_call.1} parent=35 // pred_region
          %258 = dma.done [#allocation6], 64
        $region48: #{tpu_custom_call.1} parent=35 // pred_fallthru
          _
        // Predicated region
        $region49: #{tpu_custom_call.1} parent=35 // pred_check
          %p259 = pneg %p121
        $region50: #{tpu_custom_call.1} parent=35 // pred_check_branch
          %261 = sbr.rel (%p259) target = $region52
        $region51: #{tpu_custom_call.1} parent=35 // pred_region
          %263 = dma.done [#allocation9], 8192
        $region52: #{tpu_custom_call.1} parent=35 // pred_fallthru
          _
        %s264 = sand.u32 %s45, 1
        %s265 = scalar_lea.sflag [#allocation3], %s264
        %s266 = sand.u32 %s45, 1
        %s267 = smul.addr %s266, 256
        %s268 = scalar_lea.vmem [#allocation2], %s267
        %p269 = pneg %p58
        %p270 = pneg %p55
        %p271 = pneg %p79
        %p272 = pneg %p76
        %p273 = pneg %p100
        %p274 = pneg %p97
        %p275 = pneg %p121
        %p276 = pneg %p118
        %p277 = pneg %p149
        %p278 = pneg %p146
        %s279 = sand.u32 %s136, 1
        %s280 = scalar_lea.sflag [#allocation4], %s279
        %s281 = sand.u32 %s136, 1
        %s282 = smul.addr %s281, 256
        %s283 = scalar_lea.vmem [#allocation10], %s282
        %s284 = smul.u32 2, %s28
        %s285 = smul.u32 2, %s28
        %v286 = vld [vmem:[%s243] sm:$0xff]
        %v287 = vld [vmem:[%s243 + $0x8] sm:$0xff]
        %v288 = vld [vmem:[%s243 + $0x10] sm:$0xff]
        %v289 = vld [vmem:[%s243 + $0x18] sm:$0xff]
        %v290 = vld [vmem:[%s243 + $0x20] sm:$0xff]
        %v291 = vld [vmem:[%s243 + $0x28] sm:$0xff]
        %v292 = vld [vmem:[%s243 + $0x30] sm:$0xff]
        %v293 = vld [vmem:[%s243 + $0x38] sm:$0xff]
        %v294 = vld [vmem:[%s243 + $0x40] sm:$0xff]
        %v295 = vld [vmem:[%s243 + $0x48] sm:$0xff]
        %v296 = vld [vmem:[%s243 + $0x50] sm:$0xff]
        %v297 = vld [vmem:[%s243 + $0x58] sm:$0xff]
        %v298 = vld [vmem:[%s243 + $0x60] sm:$0xff]
        %v299 = vld [vmem:[%s243 + $0x68] sm:$0xff]
        %v300 = vld [vmem:[%s243 + $0x70] sm:$0xff]
        %v301 = vld [vmem:[%s243 + $0x78] sm:$0xff]
        %v302 = vld [vmem:[%s243 + $0x80] sm:$0xff]
        %v303 = vld [vmem:[%s243 + $0x88] sm:$0xff]
        %v304 = vld [vmem:[%s243 + $0x90] sm:$0xff]
        %v305 = vld [vmem:[%s243 + $0x98] sm:$0xff]
        %v306 = vld [vmem:[%s243 + $0xa0] sm:$0xff]
        %v307 = vld [vmem:[%s243 + $0xa8] sm:$0xff]
        %v308 = vld [vmem:[%s243 + $0xb0] sm:$0xff]
        %v309 = vld [vmem:[%s243 + $0xb8] sm:$0xff]
        %v310 = vld [vmem:[%s243 + $0xc0] sm:$0xff]
        %v311 = vld [vmem:[%s243 + $0xc8] sm:$0xff]
        %v312 = vld [vmem:[%s243 + $0xd0] sm:$0xff]
        %v313 = vld [vmem:[%s243 + $0xd8] sm:$0xff]
        %v314 = vld [vmem:[%s243 + $0xe0] sm:$0xff]
        %v315 = vld [vmem:[%s243 + $0xe8] sm:$0xff]
        %v316 = vld [vmem:[%s243 + $0xf0] sm:$0xff]
        %v317 = vld [vmem:[%s243 + $0xf8] sm:$0xff]
        %318 = vxpose.xlu0.b32.start [1/16] %v286, 128
        %319 = vxpose.xlu0.b32.cont [2/16] %v288, 128
        %320 = vxpose.xlu0.b32.cont [3/16] %v290, 128
        %321 = vxpose.xlu0.b32.cont [4/16] %v292, 128
        %322 = vxpose.xlu0.b32.cont [5/16] %v294, 128
        %323 = vxpose.xlu0.b32.cont [6/16] %v296, 128
        %324 = vxpose.xlu0.b32.cont [7/16] %v298, 128
        %325 = vxpose.xlu0.b32.cont [8/16] %v300, 128
        %326 = vxpose.xlu0.b32.cont [9/16] %v302, 128
        %327 = vxpose.xlu0.b32.cont [10/16] %v304, 128
        %328 = vxpose.xlu0.b32.cont [11/16] %v306, 128
        %329 = vxpose.xlu0.b32.cont [12/16] %v308, 128
        %330 = vxpose.xlu0.b32.cont [13/16] %v310, 128
        %331 = vxpose.xlu0.b32.cont [14/16] %v312, 128
        %332 = vxpose.xlu0.b32.cont [15/16] %v314, 128
        %333 = vxpose.xlu0.b32.end [16/16] %v316, 128
        %v334 = vpop.trf.xlu0
        %v335 = vpop.trf.xlu0
        %v336 = vpop.trf.xlu0
        %v337 = vpop.trf.xlu0
        %v338 = vpop.trf.xlu0
        %v339 = vpop.trf.xlu0
        %v340 = vpop.trf.xlu0
        %v341 = vpop.trf.xlu0
        %v342 = vpop.trf.xlu0
        %v343 = vpop.trf.xlu0
        %v344 = vpop.trf.xlu0
        %v345 = vpop.trf.xlu0
        %v346 = vpop.trf.xlu0
        %v347 = vpop.trf.xlu0
        %v348 = vpop.trf.xlu0
        %v349 = vpop.trf.xlu0
        %350 = vxpose.xlu0.b32.start [1/16] %v287, 128
        %351 = vxpose.xlu0.b32.cont [2/16] %v289, 128
        %352 = vxpose.xlu0.b32.cont [3/16] %v291, 128
        %353 = vxpose.xlu0.b32.cont [4/16] %v293, 128
        %354 = vxpose.xlu0.b32.cont [5/16] %v295, 128
        %355 = vxpose.xlu0.b32.cont [6/16] %v297, 128
        %356 = vxpose.xlu0.b32.cont [7/16] %v299, 128
        %357 = vxpose.xlu0.b32.cont [8/16] %v301, 128
        %358 = vxpose.xlu0.b32.cont [9/16] %v303, 128
        %359 = vxpose.xlu0.b32.cont [10/16] %v305, 128
        %360 = vxpose.xlu0.b32.cont [11/16] %v307, 128
        %361 = vxpose.xlu0.b32.cont [12/16] %v309, 128
        %362 = vxpose.xlu0.b32.cont [13/16] %v311, 128
        %363 = vxpose.xlu0.b32.cont [14/16] %v313, 128
        %364 = vxpose.xlu0.b32.cont [15/16] %v315, 128
        %365 = vxpose.xlu0.b32.end [16/16] %v317, 128
        %v366 = vpop.trf.xlu0
        %v367 = vpop.trf.xlu0
        %v368 = vpop.trf.xlu0
        %v369 = vpop.trf.xlu0
        %v370 = vpop.trf.xlu0
        %v371 = vpop.trf.xlu0
        %v372 = vpop.trf.xlu0
        %v373 = vpop.trf.xlu0
        %v374 = vpop.trf.xlu0
        %v375 = vpop.trf.xlu0
        %v376 = vpop.trf.xlu0
        %v377 = vpop.trf.xlu0
        %v378 = vpop.trf.xlu0
        %v379 = vpop.trf.xlu0
        %v380 = vpop.trf.xlu0
        %v381 = vpop.trf.xlu0
        %v382 = vpack.c.bf16 %v335, %v334
        %v383 = vpack.c.bf16 %v337, %v336
        %v384 = vpack.c.bf16 %v339, %v338
        %v385 = vpack.c.bf16 %v341, %v340
        %v386 = vpack.c.bf16 %v343, %v342
        %v387 = vpack.c.bf16 %v345, %v344
        %v388 = vpack.c.bf16 %v347, %v346
        %v389 = vpack.c.bf16 %v349, %v348
        %v390 = vpack.c.bf16 %v367, %v366
        %v391 = vpack.c.bf16 %v369, %v368
        %v392 = vpack.c.bf16 %v371, %v370
        %v393 = vpack.c.bf16 %v373, %v372
        %v394 = vpack.c.bf16 %v375, %v374
        %v395 = vpack.c.bf16 %v377, %v376
        %v396 = vpack.c.bf16 %v379, %v378
        %v397 = vpack.c.bf16 %v381, %v380
        %v398 = vld [vmem:[#allocation5] sm:$0xff]
        %v399 = vld [vmem:[#allocation5 + $0x8] sm:$0xff]
        %v400 = vld [vmem:[#allocation5 + $0x10] sm:$0xff]
        %v401 = vld [vmem:[#allocation5 + $0x18] sm:$0xff]
        %v402 = vld [vmem:[#allocation5 + $0x20] sm:$0xff]
        %v403 = vld [vmem:[#allocation5 + $0x28] sm:$0xff]
        %v404 = vld [vmem:[#allocation5 + $0x30] sm:$0xff]
        %v405 = vld [vmem:[#allocation5 + $0x38] sm:$0xff]
        %v406 = vld [vmem:[#allocation5 + $0x40] sm:$0xff]
        %v407 = vld [vmem:[#allocation5 + $0x48] sm:$0xff]
        %v408 = vld [vmem:[#allocation5 + $0x50] sm:$0xff]
        %v409 = vld [vmem:[#allocation5 + $0x58] sm:$0xff]
        %v410 = vld [vmem:[#allocation5 + $0x60] sm:$0xff]
        %v411 = vld [vmem:[#allocation5 + $0x68] sm:$0xff]
        %v412 = vld [vmem:[#allocation5 + $0x70] sm:$0xff]
        %v413 = vld [vmem:[#allocation5 + $0x78] sm:$0xff]
        %v414 = vld [vmem:[#allocation5 + $0x80] sm:$0xff]
        %v415 = vld [vmem:[#allocation5 + $0x88] sm:$0xff]
        %v416 = vld [vmem:[#allocation5 + $0x90] sm:$0xff]
        %v417 = vld [vmem:[#allocation5 + $0x98] sm:$0xff]
        %v418 = vld [vmem:[#allocation5 + $0xa0] sm:$0xff]
        %v419 = vld [vmem:[#allocation5 + $0xa8] sm:$0xff]
        %v420 = vld [vmem:[#allocation5 + $0xb0] sm:$0xff]
        %v421 = vld [vmem:[#allocation5 + $0xb8] sm:$0xff]
        %v422 = vld [vmem:[#allocation5 + $0xc0] sm:$0xff]
        %v423 = vld [vmem:[#allocation5 + $0xc8] sm:$0xff]
        %v424 = vld [vmem:[#allocation5 + $0xd0] sm:$0xff]
        %v425 = vld [vmem:[#allocation5 + $0xd8] sm:$0xff]
        %v426 = vld [vmem:[#allocation5 + $0xe0] sm:$0xff]
        %v427 = vld [vmem:[#allocation5 + $0xe8] sm:$0xff]
        %v428 = vld [vmem:[#allocation5 + $0xf0] sm:$0xff]
        %v429 = vld [vmem:[#allocation5 + $0xf8] sm:$0xff]
        %v430 = vld [vmem:[#allocation7] sm:$0xf]
        %v432 = vperm.slane %v430, 0
        %v433 = vperm.slane %v430, 1
        %v434 = vperm.slane %v430, 2
        %v435 = vperm.slane %v430, 3
        %v472 = vunpack.c.l.b16 %v398
        %v473 = vunpack.c.h.b16 %v398
        %v474 = vunpack.c.l.b16 %v399
        %v475 = vunpack.c.h.b16 %v399
        %v476 = vunpack.c.l.b16 %v400
        %v477 = vunpack.c.h.b16 %v400
        %v478 = vunpack.c.l.b16 %v401
        %v479 = vunpack.c.h.b16 %v401
        %v480 = vunpack.c.l.b16 %v402
        %v481 = vunpack.c.h.b16 %v402
        %v482 = vunpack.c.l.b16 %v403
        %v483 = vunpack.c.h.b16 %v403
        %v484 = vunpack.c.l.b16 %v404
        %v485 = vunpack.c.h.b16 %v404
        %v486 = vunpack.c.l.b16 %v405
        %v487 = vunpack.c.h.b16 %v405
        %v488 = vunpack.c.l.b16 %v406
        %v489 = vunpack.c.h.b16 %v406
        %v490 = vunpack.c.l.b16 %v407
        %v491 = vunpack.c.h.b16 %v407
        %v492 = vunpack.c.l.b16 %v408
        %v493 = vunpack.c.h.b16 %v408
        %v494 = vunpack.c.l.b16 %v409
        %v495 = vunpack.c.h.b16 %v409
        %v496 = vunpack.c.l.b16 %v410
        %v497 = vunpack.c.h.b16 %v410
        %v498 = vunpack.c.l.b16 %v411
        %v499 = vunpack.c.h.b16 %v411
        %v500 = vunpack.c.l.b16 %v412
        %v501 = vunpack.c.h.b16 %v412
        %v502 = vunpack.c.l.b16 %v413
        %v503 = vunpack.c.h.b16 %v413
        %v504 = vunpack.c.l.b16 %v414
        %v505 = vunpack.c.h.b16 %v414
        %v506 = vunpack.c.l.b16 %v415
        %v507 = vunpack.c.h.b16 %v415
        %v508 = vunpack.c.l.b16 %v416
        %v509 = vunpack.c.h.b16 %v416
        %v510 = vunpack.c.l.b16 %v417
        %v511 = vunpack.c.h.b16 %v417
        %v512 = vunpack.c.l.b16 %v418
        %v513 = vunpack.c.h.b16 %v418
        %v514 = vunpack.c.l.b16 %v419
        %v515 = vunpack.c.h.b16 %v419
        %v516 = vunpack.c.l.b16 %v420
        %v517 = vunpack.c.h.b16 %v420
        %v518 = vunpack.c.l.b16 %v421
        %v519 = vunpack.c.h.b16 %v421
        %v520 = vunpack.c.l.b16 %v422
        %v521 = vunpack.c.h.b16 %v422
        %v522 = vunpack.c.l.b16 %v423
        %v523 = vunpack.c.h.b16 %v423
        %v524 = vunpack.c.l.b16 %v424
        %v525 = vunpack.c.h.b16 %v424
        %v526 = vunpack.c.l.b16 %v425
        %v527 = vunpack.c.h.b16 %v425
        %v528 = vunpack.c.l.b16 %v426
        %v529 = vunpack.c.h.b16 %v426
        %v530 = vunpack.c.l.b16 %v427
        %v531 = vunpack.c.h.b16 %v427
        %v532 = vunpack.c.l.b16 %v428
        %v533 = vunpack.c.h.b16 %v428
        %v534 = vunpack.c.l.b16 %v429
        %v535 = vunpack.c.h.b16 %v429
        %v536 = vpack.c.b16 %v476, %v472
        %v537 = vpack.c.b16 %v477, %v473
        %v538 = vpack.c.b16 %v478, %v474
        %v539 = vpack.c.b16 %v479, %v475
        %v540 = vpack.c.b16 %v484, %v480
        %v541 = vpack.c.b16 %v485, %v481
        %v542 = vpack.c.b16 %v486, %v482
        %v543 = vpack.c.b16 %v487, %v483
        %v544 = vpack.c.b16 %v492, %v488
        %v545 = vpack.c.b16 %v493, %v489
        %v546 = vpack.c.b16 %v494, %v490
        %v547 = vpack.c.b16 %v495, %v491
        %v548 = vpack.c.b16 %v500, %v496
        %v549 = vpack.c.b16 %v501, %v497
        %v550 = vpack.c.b16 %v502, %v498
        %v551 = vpack.c.b16 %v503, %v499
        %v552 = vpack.c.b16 %v508, %v504
        %v553 = vpack.c.b16 %v509, %v505
        %v554 = vpack.c.b16 %v510, %v506
        %v555 = vpack.c.b16 %v511, %v507
        %v556 = vpack.c.b16 %v516, %v512
        %v557 = vpack.c.b16 %v517, %v513
        %v558 = vpack.c.b16 %v518, %v514
        %v559 = vpack.c.b16 %v519, %v515
        %v560 = vpack.c.b16 %v524, %v520
        %v561 = vpack.c.b16 %v525, %v521
        %v562 = vpack.c.b16 %v526, %v522
        %v563 = vpack.c.b16 %v527, %v523
        %v564 = vpack.c.b16 %v532, %v528
        %v565 = vpack.c.b16 %v533, %v529
        %v566 = vpack.c.b16 %v534, %v530
        %v567 = vpack.c.b16 %v535, %v531
        %600 = vmatpush.bf16.msra.mxu0 %v564
        %601 = vmatpush.bf16.msra.mxu0 %v560
        %602 = vmatpush.bf16.msra.mxu0 %v556
        %603 = vmatpush.bf16.msra.mxu0 %v552
        %604 = vmatpush.bf16.msra.mxu0 %v548
        %605 = vmatpush.bf16.msra.mxu0 %v544
        %606 = vmatpush.bf16.msra.mxu0 %v540
        %607 = vmatpush.bf16.msra.mxu0 %v536
        %608 = vmatmul.bf16.gmra.mxu0 %v382
        %v609 = vpop.f32.mrf.mxu0
        %v610 = vadd.f32 %v432, %v609
        %v611 = vpop.f32.mrf.mxu0
        %v612 = vadd.f32 %v432, %v611
        %613 = vmatmul.bf16.gmra.mxu0 %v383
        %v614 = vpop.f32.mrf.mxu0
        %v615 = vadd.f32 %v432, %v614
        %v616 = vpop.f32.mrf.mxu0
        %v617 = vadd.f32 %v432, %v616
        %618 = vmatmul.bf16.gmra.mxu0 %v384
        %v619 = vpop.f32.mrf.mxu0
        %v620 = vadd.f32 %v432, %v619
        %v621 = vpop.f32.mrf.mxu0
        %v622 = vadd.f32 %v432, %v621
        %623 = vmatmul.bf16.gmra.mxu0 %v385
        %v624 = vpop.f32.mrf.mxu0
        %v625 = vadd.f32 %v432, %v624
        %v626 = vpop.f32.mrf.mxu0
        %v627 = vadd.f32 %v432, %v626
        %628 = vmatmul.bf16.gmra.mxu0 %v386
        %v629 = vpop.f32.mrf.mxu0
        %v630 = vadd.f32 %v432, %v629
        %v631 = vpop.f32.mrf.mxu0
        %v632 = vadd.f32 %v432, %v631
        %633 = vmatmul.bf16.gmra.mxu0 %v387
        %v634 = vpop.f32.mrf.mxu0
        %v635 = vadd.f32 %v432, %v634
        %v636 = vpop.f32.mrf.mxu0
        %v637 = vadd.f32 %v432, %v636
        %638 = vmatmul.bf16.gmra.mxu0 %v388
        %v639 = vpop.f32.mrf.mxu0
        %v640 = vadd.f32 %v432, %v639
        %v641 = vpop.f32.mrf.mxu0
        %v642 = vadd.f32 %v432, %v641
        %643 = vmatmul.bf16.gmra.mxu0 %v389
        %v644 = vpop.f32.mrf.mxu0
        %v645 = vadd.f32 %v432, %v644
        %v646 = vpop.f32.mrf.mxu0
        %v647 = vadd.f32 %v432, %v646
        %648 = vmatmul.bf16.gmra.mxu0 %v390
        %v649 = vpop.f32.mrf.mxu0
        %v650 = vadd.f32 %v432, %v649
        %v651 = vpop.f32.mrf.mxu0
        %v652 = vadd.f32 %v432, %v651
        %653 = vmatmul.bf16.gmra.mxu0 %v391
        %v654 = vpop.f32.mrf.mxu0
        %v655 = vadd.f32 %v432, %v654
        %v656 = vpop.f32.mrf.mxu0
        %v657 = vadd.f32 %v432, %v656
        %658 = vmatmul.bf16.gmra.mxu0 %v392
        %v659 = vpop.f32.mrf.mxu0
        %v660 = vadd.f32 %v432, %v659
        %v661 = vpop.f32.mrf.mxu0
        %v662 = vadd.f32 %v432, %v661
        %663 = vmatmul.bf16.gmra.mxu0 %v393
        %v664 = vpop.f32.mrf.mxu0
        %v665 = vadd.f32 %v432, %v664
        %v666 = vpop.f32.mrf.mxu0
        %v667 = vadd.f32 %v432, %v666
        %668 = vmatmul.bf16.gmra.mxu0 %v394
        %v669 = vpop.f32.mrf.mxu0
        %v670 = vadd.f32 %v432, %v669
        %v671 = vpop.f32.mrf.mxu0
        %v672 = vadd.f32 %v432, %v671
        %673 = vmatmul.bf16.gmra.mxu0 %v395
        %v674 = vpop.f32.mrf.mxu0
        %v675 = vadd.f32 %v432, %v674
        %v676 = vpop.f32.mrf.mxu0
        %v677 = vadd.f32 %v432, %v676
        %678 = vmatmul.bf16.gmra.mxu0 %v396
        %v679 = vpop.f32.mrf.mxu0
        %v680 = vadd.f32 %v432, %v679
        %v681 = vpop.f32.mrf.mxu0
        %v682 = vadd.f32 %v432, %v681
        %683 = vmatmul.bf16.gmra.mxu0 %v397
        %v684 = vpop.f32.mrf.mxu0
        %v685 = vadd.f32 %v432, %v684
        %v686 = vpop.f32.mrf.mxu0
        %v687 = vadd.f32 %v432, %v686
        %688 = vdwg.mxu0
        %689 = vmatpush.bf16.msra.mxu0 %v565
        %690 = vmatpush.bf16.msra.mxu0 %v561
        %691 = vmatpush.bf16.msra.mxu0 %v557
        %692 = vmatpush.bf16.msra.mxu0 %v553
        %693 = vmatpush.bf16.msra.mxu0 %v549
        %694 = vmatpush.bf16.msra.mxu0 %v545
        %695 = vmatpush.bf16.msra.mxu0 %v541
        %696 = vmatpush.bf16.msra.mxu0 %v537
        %697 = vmatmul.bf16.gmra.mxu0 %v382
        %v698 = vpop.f32.mrf.mxu0
        %v699 = vadd.f32 %v433, %v698
        %v700 = vpop.f32.mrf.mxu0
        %v701 = vadd.f32 %v433, %v700
        %702 = vmatmul.bf16.gmra.mxu0 %v383
        %v703 = vpop.f32.mrf.mxu0
        %v704 = vadd.f32 %v433, %v703
        %v705 = vpop.f32.mrf.mxu0
        %v706 = vadd.f32 %v433, %v705
        %707 = vmatmul.bf16.gmra.mxu0 %v384
        %v708 = vpop.f32.mrf.mxu0
        %v709 = vadd.f32 %v433, %v708
        %v710 = vpop.f32.mrf.mxu0
        %v711 = vadd.f32 %v433, %v710
        %712 = vmatmul.bf16.gmra.mxu0 %v385
        %v713 = vpop.f32.mrf.mxu0
        %v714 = vadd.f32 %v433, %v713
        %v715 = vpop.f32.mrf.mxu0
        %v716 = vadd.f32 %v433, %v715
        %717 = vmatmul.bf16.gmra.mxu0 %v386
        %v718 = vpop.f32.mrf.mxu0
        %v719 = vadd.f32 %v433, %v718
        %v720 = vpop.f32.mrf.mxu0
        %v721 = vadd.f32 %v433, %v720
        %722 = vmatmul.bf16.gmra.mxu0 %v387
        %v723 = vpop.f32.mrf.mxu0
        %v724 = vadd.f32 %v433, %v723
        %v725 = vpop.f32.mrf.mxu0
        %v726 = vadd.f32 %v433, %v725
        %727 = vmatmul.bf16.gmra.mxu0 %v388
        %v728 = vpop.f32.mrf.mxu0
        %v729 = vadd.f32 %v433, %v728
        %v730 = vpop.f32.mrf.mxu0
        %v731 = vadd.f32 %v433, %v730
        %732 = vmatmul.bf16.gmra.mxu0 %v389
        %v733 = vpop.f32.mrf.mxu0
        %v734 = vadd.f32 %v433, %v733
        %v735 = vpop.f32.mrf.mxu0
        %v736 = vadd.f32 %v433, %v735
        %737 = vmatmul.bf16.gmra.mxu0 %v390
        %v738 = vpop.f32.mrf.mxu0
        %v739 = vadd.f32 %v433, %v738
        %v740 = vpop.f32.mrf.mxu0
        %v741 = vadd.f32 %v433, %v740
        %742 = vmatmul.bf16.gmra.mxu0 %v391
        %v743 = vpop.f32.mrf.mxu0
        %v744 = vadd.f32 %v433, %v743
        %v745 = vpop.f32.mrf.mxu0
        %v746 = vadd.f32 %v433, %v745
        %747 = vmatmul.bf16.gmra.mxu0 %v392
        %v748 = vpop.f32.mrf.mxu0
        %v749 = vadd.f32 %v433, %v748
        %v750 = vpop.f32.mrf.mxu0
        %v751 = vadd.f32 %v433, %v750
        %752 = vmatmul.bf16.gmra.mxu0 %v393
        %v753 = vpop.f32.mrf.mxu0
        %v754 = vadd.f32 %v433, %v753
        %v755 = vpop.f32.mrf.mxu0
        %v756 = vadd.f32 %v433, %v755
        %757 = vmatmul.bf16.gmra.mxu0 %v394
        %v758 = vpop.f32.mrf.mxu0
        %v759 = vadd.f32 %v433, %v758
        %v760 = vpop.f32.mrf.mxu0
        %v761 = vadd.f32 %v433, %v760
        %762 = vmatmul.bf16.gmra.mxu0 %v395
        %v763 = vpop.f32.mrf.mxu0
        %v764 = vadd.f32 %v433, %v763
        %v765 = vpop.f32.mrf.mxu0
        %v766 = vadd.f32 %v433, %v765
        %767 = vmatmul.bf16.gmra.mxu0 %v396
        %v768 = vpop.f32.mrf.mxu0
        %v769 = vadd.f32 %v433, %v768
        %v770 = vpop.f32.mrf.mxu0
        %v771 = vadd.f32 %v433, %v770
        %772 = vmatmul.bf16.gmra.mxu0 %v397
        %v773 = vpop.f32.mrf.mxu0
        %v774 = vadd.f32 %v433, %v773
        %v775 = vpop.f32.mrf.mxu0
        %v776 = vadd.f32 %v433, %v775
        %777 = vdwg.mxu0
        %778 = vmatpush.bf16.msra.mxu0 %v566
        %779 = vmatpush.bf16.msra.mxu0 %v562
        %780 = vmatpush.bf16.msra.mxu0 %v558
        %781 = vmatpush.bf16.msra.mxu0 %v554
        %782 = vmatpush.bf16.msra.mxu0 %v550
        %783 = vmatpush.bf16.msra.mxu0 %v546
        %784 = vmatpush.bf16.msra.mxu0 %v542
        %785 = vmatpush.bf16.msra.mxu0 %v538
        %786 = vmatmul.bf16.gmra.mxu0 %v382
        %v787 = vpop.f32.mrf.mxu0
        %v788 = vadd.f32 %v434, %v787
        %v789 = vpop.f32.mrf.mxu0
        %v790 = vadd.f32 %v434, %v789
        %791 = vmatmul.bf16.gmra.mxu0 %v383
        %v792 = vpop.f32.mrf.mxu0
        %v793 = vadd.f32 %v434, %v792
        %v794 = vpop.f32.mrf.mxu0
        %v795 = vadd.f32 %v434, %v794
        %796 = vmatmul.bf16.gmra.mxu0 %v384
        %v797 = vpop.f32.mrf.mxu0
        %v798 = vadd.f32 %v434, %v797
        %v799 = vpop.f32.mrf.mxu0
        %v800 = vadd.f32 %v434, %v799
        %801 = vmatmul.bf16.gmra.mxu0 %v385
        %v802 = vpop.f32.mrf.mxu0
        %v803 = vadd.f32 %v434, %v802
        %v804 = vpop.f32.mrf.mxu0
        %v805 = vadd.f32 %v434, %v804
        %806 = vmatmul.bf16.gmra.mxu0 %v386
        %v807 = vpop.f32.mrf.mxu0
        %v808 = vadd.f32 %v434, %v807
        %v809 = vpop.f32.mrf.mxu0
        %v810 = vadd.f32 %v434, %v809
        %811 = vmatmul.bf16.gmra.mxu0 %v387
        %v812 = vpop.f32.mrf.mxu0
        %v813 = vadd.f32 %v434, %v812
        %v814 = vpop.f32.mrf.mxu0
        %v815 = vadd.f32 %v434, %v814
        %816 = vmatmul.bf16.gmra.mxu0 %v388
        %v817 = vpop.f32.mrf.mxu0
        %v818 = vadd.f32 %v434, %v817
        %v819 = vpop.f32.mrf.mxu0
        %v820 = vadd.f32 %v434, %v819
        %821 = vmatmul.bf16.gmra.mxu0 %v389
        %v822 = vpop.f32.mrf.mxu0
        %v823 = vadd.f32 %v434, %v822
        %v824 = vpop.f32.mrf.mxu0
        %v825 = vadd.f32 %v434, %v824
        %826 = vmatmul.bf16.gmra.mxu0 %v390
        %v827 = vpop.f32.mrf.mxu0
        %v828 = vadd.f32 %v434, %v827
        %v829 = vpop.f32.mrf.mxu0
        %v830 = vadd.f32 %v434, %v829
        %831 = vmatmul.bf16.gmra.mxu0 %v391
        %v832 = vpop.f32.mrf.mxu0
        %v833 = vadd.f32 %v434, %v832
        %v834 = vpop.f32.mrf.mxu0
        %v835 = vadd.f32 %v434, %v834
        %836 = vmatmul.bf16.gmra.mxu0 %v392
        %v837 = vpop.f32.mrf.mxu0
        %v838 = vadd.f32 %v434, %v837
        %v839 = vpop.f32.mrf.mxu0
        %v840 = vadd.f32 %v434, %v839
        %841 = vmatmul.bf16.gmra.mxu0 %v393
        %v842 = vpop.f32.mrf.mxu0
        %v843 = vadd.f32 %v434, %v842
        %v844 = vpop.f32.mrf.mxu0
        %v845 = vadd.f32 %v434, %v844
        %846 = vmatmul.bf16.gmra.mxu0 %v394
        %v847 = vpop.f32.mrf.mxu0
        %v848 = vadd.f32 %v434, %v847
        %v849 = vpop.f32.mrf.mxu0
        %v850 = vadd.f32 %v434, %v849
        %851 = vmatmul.bf16.gmra.mxu0 %v395
        %v852 = vpop.f32.mrf.mxu0
        %v853 = vadd.f32 %v434, %v852
        %v854 = vpop.f32.mrf.mxu0
        %v855 = vadd.f32 %v434, %v854
        %856 = vmatmul.bf16.gmra.mxu0 %v396
        %v857 = vpop.f32.mrf.mxu0
        %v858 = vadd.f32 %v434, %v857
        %v859 = vpop.f32.mrf.mxu0
        %v860 = vadd.f32 %v434, %v859
        %861 = vmatmul.bf16.gmra.mxu0 %v397
        %v862 = vpop.f32.mrf.mxu0
        %v863 = vadd.f32 %v434, %v862
        %v864 = vpop.f32.mrf.mxu0
        %v865 = vadd.f32 %v434, %v864
        %866 = vdwg.mxu0
        %867 = vmatpush.bf16.msra.mxu0 %v567
        %868 = vmatpush.bf16.msra.mxu0 %v563
        %869 = vmatpush.bf16.msra.mxu0 %v559
        %870 = vmatpush.bf16.msra.mxu0 %v555
        %871 = vmatpush.bf16.msra.mxu0 %v551
        %872 = vmatpush.bf16.msra.mxu0 %v547
        %873 = vmatpush.bf16.msra.mxu0 %v543
        %874 = vmatpush.bf16.msra.mxu0 %v539
        %875 = vmatmul.bf16.gmra.mxu0 %v382
        %v876 = vpop.f32.mrf.mxu0
        %v877 = vadd.f32 %v435, %v876
        %v878 = vpop.f32.mrf.mxu0
        %v879 = vadd.f32 %v435, %v878
        %880 = vmatmul.bf16.gmra.mxu0 %v383
        %v881 = vpop.f32.mrf.mxu0
        %v882 = vadd.f32 %v435, %v881
        %v883 = vpop.f32.mrf.mxu0
        %v884 = vadd.f32 %v435, %v883
        %885 = vmatmul.bf16.gmra.mxu0 %v384
        %v886 = vpop.f32.mrf.mxu0
        %v887 = vadd.f32 %v435, %v886
        %v888 = vpop.f32.mrf.mxu0
        %v889 = vadd.f32 %v435, %v888
        %890 = vmatmul.bf16.gmra.mxu0 %v385
        %v891 = vpop.f32.mrf.mxu0
        %v892 = vadd.f32 %v435, %v891
        %v893 = vpop.f32.mrf.mxu0
        %v894 = vadd.f32 %v435, %v893
        %895 = vmatmul.bf16.gmra.mxu0 %v386
        %v896 = vpop.f32.mrf.mxu0
        %v897 = vadd.f32 %v435, %v896
        %v898 = vpop.f32.mrf.mxu0
        %v899 = vadd.f32 %v435, %v898
        %900 = vmatmul.bf16.gmra.mxu0 %v387
        %v901 = vpop.f32.mrf.mxu0
        %v902 = vadd.f32 %v435, %v901
        %v903 = vpop.f32.mrf.mxu0
        %v904 = vadd.f32 %v435, %v903
        %905 = vmatmul.bf16.gmra.mxu0 %v388
        %v906 = vpop.f32.mrf.mxu0
        %v907 = vadd.f32 %v435, %v906
        %v908 = vpop.f32.mrf.mxu0
        %v909 = vadd.f32 %v435, %v908
        %910 = vmatmul.bf16.gmra.mxu0 %v389
        %v911 = vpop.f32.mrf.mxu0
        %v912 = vadd.f32 %v435, %v911
        %v913 = vpop.f32.mrf.mxu0
        %v914 = vadd.f32 %v435, %v913
        %915 = vmatmul.bf16.gmra.mxu0 %v390
        %v916 = vpop.f32.mrf.mxu0
        %v917 = vadd.f32 %v435, %v916
        %v918 = vpop.f32.mrf.mxu0
        %v919 = vadd.f32 %v435, %v918
        %920 = vmatmul.bf16.gmra.mxu0 %v391
        %v921 = vpop.f32.mrf.mxu0
        %v922 = vadd.f32 %v435, %v921
        %v923 = vpop.f32.mrf.mxu0
        %v924 = vadd.f32 %v435, %v923
        %925 = vmatmul.bf16.gmra.mxu0 %v392
        %v926 = vpop.f32.mrf.mxu0
        %v927 = vadd.f32 %v435, %v926
        %v928 = vpop.f32.mrf.mxu0
        %v929 = vadd.f32 %v435, %v928
        %930 = vmatmul.bf16.gmra.mxu0 %v393
        %v931 = vpop.f32.mrf.mxu0
        %v932 = vadd.f32 %v435, %v931
        %v933 = vpop.f32.mrf.mxu0
        %v934 = vadd.f32 %v435, %v933
        %935 = vmatmul.bf16.gmra.mxu0 %v394
        %v936 = vpop.f32.mrf.mxu0
        %v937 = vadd.f32 %v435, %v936
        %v938 = vpop.f32.mrf.mxu0
        %v939 = vadd.f32 %v435, %v938
        %940 = vmatmul.bf16.gmra.mxu0 %v395
        %v941 = vpop.f32.mrf.mxu0
        %v942 = vadd.f32 %v435, %v941
        %v943 = vpop.f32.mrf.mxu0
        %v944 = vadd.f32 %v435, %v943
        %945 = vmatmul.bf16.gmra.mxu0 %v396
        %v946 = vpop.f32.mrf.mxu0
        %v947 = vadd.f32 %v435, %v946
        %v948 = vpop.f32.mrf.mxu0
        %v949 = vadd.f32 %v435, %v948
        %950 = vmatmul.bf16.gmra.mxu0 %v397
        %v951 = vpop.f32.mrf.mxu0
        %v952 = vadd.f32 %v435, %v951
        %v953 = vpop.f32.mrf.mxu0
        %v954 = vadd.f32 %v435, %v953
        %955 = vdwg.mxu0
        %v956 = vmin.f32 %v610, %v699
        %v957 = vmin.f32 %v956, %v788
        %v958 = vmin.f32 %v957, %v877
        %959 = vmin.xlane.f32.xlu0 %v958
        %v960 = vpop.xlane.xlu0 %959
        %v961 = vmin.f32 %v612, %v701
        %v962 = vmin.f32 %v961, %v790
        %v963 = vmin.f32 %v962, %v879
        %964 = vmin.xlane.f32.xlu0 %v963
        %v965 = vpop.xlane.xlu0 %964
        %v966 = vmin.f32 %v615, %v704
        %v967 = vmin.f32 %v966, %v793
        %v968 = vmin.f32 %v967, %v882
        %969 = vmin.xlane.f32.xlu0 %v968
        %v970 = vpop.xlane.xlu0 %969
        %v971 = vmin.f32 %v617, %v706
        %v972 = vmin.f32 %v971, %v795
        %v973 = vmin.f32 %v972, %v884
        %974 = vmin.xlane.f32.xlu0 %v973
        %v975 = vpop.xlane.xlu0 %974
        %v976 = vmin.f32 %v620, %v709
        %v977 = vmin.f32 %v976, %v798
        %v978 = vmin.f32 %v977, %v887
        %979 = vmin.xlane.f32.xlu0 %v978
        %v980 = vpop.xlane.xlu0 %979
        %v981 = vmin.f32 %v622, %v711
        %v982 = vmin.f32 %v981, %v800
        %v983 = vmin.f32 %v982, %v889
        %984 = vmin.xlane.f32.xlu0 %v983
        %v985 = vpop.xlane.xlu0 %984
        %v986 = vmin.f32 %v625, %v714
        %v987 = vmin.f32 %v986, %v803
        %v988 = vmin.f32 %v987, %v892
        %989 = vmin.xlane.f32.xlu0 %v988
        %v990 = vpop.xlane.xlu0 %989
        %v991 = vmin.f32 %v627, %v716
        %v992 = vmin.f32 %v991, %v805
        %v993 = vmin.f32 %v992, %v894
        %994 = vmin.xlane.f32.xlu0 %v993
        %v995 = vpop.xlane.xlu0 %994
        %v996 = vmin.f32 %v630, %v719
        %v997 = vmin.f32 %v996, %v808
        %v998 = vmin.f32 %v997, %v897
        %999 = vmin.xlane.f32.xlu0 %v998
        %v1000 = vpop.xlane.xlu0 %999
        %v1001 = vmin.f32 %v632, %v721
        %v1002 = vmin.f32 %v1001, %v810
        %v1003 = vmin.f32 %v1002, %v899
        %1004 = vmin.xlane.f32.xlu0 %v1003
        %v1005 = vpop.xlane.xlu0 %1004
        %v1006 = vmin.f32 %v635, %v724
        %v1007 = vmin.f32 %v1006, %v813
        %v1008 = vmin.f32 %v1007, %v902
        %1009 = vmin.xlane.f32.xlu0 %v1008
        %v1010 = vpop.xlane.xlu0 %1009
        %v1011 = vmin.f32 %v637, %v726
        %v1012 = vmin.f32 %v1011, %v815
        %v1013 = vmin.f32 %v1012, %v904
        %1014 = vmin.xlane.f32.xlu0 %v1013
        %v1015 = vpop.xlane.xlu0 %1014
        %v1016 = vmin.f32 %v640, %v729
        %v1017 = vmin.f32 %v1016, %v818
        %v1018 = vmin.f32 %v1017, %v907
        %1019 = vmin.xlane.f32.xlu0 %v1018
        %v1020 = vpop.xlane.xlu0 %1019
        %v1021 = vmin.f32 %v642, %v731
        %v1022 = vmin.f32 %v1021, %v820
        %v1023 = vmin.f32 %v1022, %v909
        %1024 = vmin.xlane.f32.xlu0 %v1023
        %v1025 = vpop.xlane.xlu0 %1024
        %v1026 = vmin.f32 %v645, %v734
        %v1027 = vmin.f32 %v1026, %v823
        %v1028 = vmin.f32 %v1027, %v912
        %1029 = vmin.xlane.f32.xlu0 %v1028
        %v1030 = vpop.xlane.xlu0 %1029
        %v1031 = vmin.f32 %v647, %v736
        %v1032 = vmin.f32 %v1031, %v825
        %v1033 = vmin.f32 %v1032, %v914
        %1034 = vmin.xlane.f32.xlu0 %v1033
        %v1035 = vpop.xlane.xlu0 %1034
        %v1036 = vmin.f32 %v650, %v739
        %v1037 = vmin.f32 %v1036, %v828
        %v1038 = vmin.f32 %v1037, %v917
        %1039 = vmin.xlane.f32.xlu0 %v1038
        %v1040 = vpop.xlane.xlu0 %1039
        %v1041 = vmin.f32 %v652, %v741
        %v1042 = vmin.f32 %v1041, %v830
        %v1043 = vmin.f32 %v1042, %v919
        %1044 = vmin.xlane.f32.xlu0 %v1043
        %v1045 = vpop.xlane.xlu0 %1044
        %v1046 = vmin.f32 %v655, %v744
        %v1047 = vmin.f32 %v1046, %v833
        %v1048 = vmin.f32 %v1047, %v922
        %1049 = vmin.xlane.f32.xlu0 %v1048
        %v1050 = vpop.xlane.xlu0 %1049
        %v1051 = vmin.f32 %v657, %v746
        %v1052 = vmin.f32 %v1051, %v835
        %v1053 = vmin.f32 %v1052, %v924
        %1054 = vmin.xlane.f32.xlu0 %v1053
        %v1055 = vpop.xlane.xlu0 %1054
        %v1056 = vmin.f32 %v660, %v749
        %v1057 = vmin.f32 %v1056, %v838
        %v1058 = vmin.f32 %v1057, %v927
        %1059 = vmin.xlane.f32.xlu0 %v1058
        %v1060 = vpop.xlane.xlu0 %1059
        %v1061 = vmin.f32 %v662, %v751
        %v1062 = vmin.f32 %v1061, %v840
        %v1063 = vmin.f32 %v1062, %v929
        %1064 = vmin.xlane.f32.xlu0 %v1063
        %v1065 = vpop.xlane.xlu0 %1064
        %v1066 = vmin.f32 %v665, %v754
        %v1067 = vmin.f32 %v1066, %v843
        %v1068 = vmin.f32 %v1067, %v932
        %1069 = vmin.xlane.f32.xlu0 %v1068
        %v1070 = vpop.xlane.xlu0 %1069
        %v1071 = vmin.f32 %v667, %v756
        %v1072 = vmin.f32 %v1071, %v845
        %v1073 = vmin.f32 %v1072, %v934
        %1074 = vmin.xlane.f32.xlu0 %v1073
        %v1075 = vpop.xlane.xlu0 %1074
        %v1076 = vmin.f32 %v670, %v759
        %v1077 = vmin.f32 %v1076, %v848
        %v1078 = vmin.f32 %v1077, %v937
        %1079 = vmin.xlane.f32.xlu0 %v1078
        %v1080 = vpop.xlane.xlu0 %1079
        %v1081 = vmin.f32 %v672, %v761
        %v1082 = vmin.f32 %v1081, %v850
        %v1083 = vmin.f32 %v1082, %v939
        %1084 = vmin.xlane.f32.xlu0 %v1083
        %v1085 = vpop.xlane.xlu0 %1084
        %v1086 = vmin.f32 %v675, %v764
        %v1087 = vmin.f32 %v1086, %v853
        %v1088 = vmin.f32 %v1087, %v942
        %1089 = vmin.xlane.f32.xlu0 %v1088
        %v1090 = vpop.xlane.xlu0 %1089
        %v1091 = vmin.f32 %v677, %v766
        %v1092 = vmin.f32 %v1091, %v855
        %v1093 = vmin.f32 %v1092, %v944
        %1094 = vmin.xlane.f32.xlu0 %v1093
        %v1095 = vpop.xlane.xlu0 %1094
        %v1096 = vmin.f32 %v680, %v769
        %v1097 = vmin.f32 %v1096, %v858
        %v1098 = vmin.f32 %v1097, %v947
        %1099 = vmin.xlane.f32.xlu0 %v1098
        %v1100 = vpop.xlane.xlu0 %1099
        %v1101 = vmin.f32 %v682, %v771
        %v1102 = vmin.f32 %v1101, %v860
        %v1103 = vmin.f32 %v1102, %v949
        %1104 = vmin.xlane.f32.xlu0 %v1103
        %v1105 = vpop.xlane.xlu0 %1104
        %v1106 = vmin.f32 %v685, %v774
        %v1107 = vmin.f32 %v1106, %v863
        %v1108 = vmin.f32 %v1107, %v952
        %1109 = vmin.xlane.f32.xlu0 %v1108
        %v1110 = vpop.xlane.xlu0 %1109
        %v1111 = vmin.f32 %v687, %v776
        %v1112 = vmin.f32 %v1111, %v865
        %v1113 = vmin.f32 %v1112, %v954
        %1114 = vmin.xlane.f32.xlu0 %v1113
        %v1115 = vpop.xlane.xlu0 %1114
        %v1116 = vlaneseq
        %v1117 = vand.u32 %v1116, 127
        %v1118 = vadd.s32 %v1117, 128
        %v1119 = vadd.s32 %v1117, 256
        %v1120 = vadd.s32 %v1117, 384
        %vm1121 = vcmp.eq.f32.partialorder %v610, %v960
        %vm1122 = vcmp.eq.f32.partialorder %v699, %v960
        %vm1123 = vcmp.eq.f32.partialorder %v788, %v960
        %vm1124 = vcmp.eq.f32.partialorder %v877, %v960
        %vm1125 = vcmp.eq.f32.partialorder %v612, %v965
        %vm1126 = vcmp.eq.f32.partialorder %v701, %v965
        %vm1127 = vcmp.eq.f32.partialorder %v790, %v965
        %vm1128 = vcmp.eq.f32.partialorder %v879, %v965
        %vm1129 = vcmp.eq.f32.partialorder %v615, %v970
        %vm1130 = vcmp.eq.f32.partialorder %v704, %v970
        %vm1131 = vcmp.eq.f32.partialorder %v793, %v970
        %vm1132 = vcmp.eq.f32.partialorder %v882, %v970
        %vm1133 = vcmp.eq.f32.partialorder %v617, %v975
        %vm1134 = vcmp.eq.f32.partialorder %v706, %v975
        %vm1135 = vcmp.eq.f32.partialorder %v795, %v975
        %vm1136 = vcmp.eq.f32.partialorder %v884, %v975
        %vm1137 = vcmp.eq.f32.partialorder %v620, %v980
        %vm1138 = vcmp.eq.f32.partialorder %v709, %v980
        %vm1139 = vcmp.eq.f32.partialorder %v798, %v980
        %vm1140 = vcmp.eq.f32.partialorder %v887, %v980
        %vm1141 = vcmp.eq.f32.partialorder %v622, %v985
        %vm1142 = vcmp.eq.f32.partialorder %v711, %v985
        %vm1143 = vcmp.eq.f32.partialorder %v800, %v985
        %vm1144 = vcmp.eq.f32.partialorder %v889, %v985
        %vm1145 = vcmp.eq.f32.partialorder %v625, %v990
        %vm1146 = vcmp.eq.f32.partialorder %v714, %v990
        %vm1147 = vcmp.eq.f32.partialorder %v803, %v990
        %vm1148 = vcmp.eq.f32.partialorder %v892, %v990
        %vm1149 = vcmp.eq.f32.partialorder %v627, %v995
        %vm1150 = vcmp.eq.f32.partialorder %v716, %v995
        %vm1151 = vcmp.eq.f32.partialorder %v805, %v995
        %vm1152 = vcmp.eq.f32.partialorder %v894, %v995
        %vm1153 = vcmp.eq.f32.partialorder %v630, %v1000
        %vm1154 = vcmp.eq.f32.partialorder %v719, %v1000
        %vm1155 = vcmp.eq.f32.partialorder %v808, %v1000
        %vm1156 = vcmp.eq.f32.partialorder %v897, %v1000
        %vm1157 = vcmp.eq.f32.partialorder %v632, %v1005
        %vm1158 = vcmp.eq.f32.partialorder %v721, %v1005
        %vm1159 = vcmp.eq.f32.partialorder %v810, %v1005
        %vm1160 = vcmp.eq.f32.partialorder %v899, %v1005
        %vm1161 = vcmp.eq.f32.partialorder %v635, %v1010
        %vm1162 = vcmp.eq.f32.partialorder %v724, %v1010
        %vm1163 = vcmp.eq.f32.partialorder %v813, %v1010
        %vm1164 = vcmp.eq.f32.partialorder %v902, %v1010
        %vm1165 = vcmp.eq.f32.partialorder %v637, %v1015
        %vm1166 = vcmp.eq.f32.partialorder %v726, %v1015
        %vm1167 = vcmp.eq.f32.partialorder %v815, %v1015
        %vm1168 = vcmp.eq.f32.partialorder %v904, %v1015
        %vm1169 = vcmp.eq.f32.partialorder %v640, %v1020
        %vm1170 = vcmp.eq.f32.partialorder %v729, %v1020
        %vm1171 = vcmp.eq.f32.partialorder %v818, %v1020
        %vm1172 = vcmp.eq.f32.partialorder %v907, %v1020
        %vm1173 = vcmp.eq.f32.partialorder %v642, %v1025
        %vm1174 = vcmp.eq.f32.partialorder %v731, %v1025
        %vm1175 = vcmp.eq.f32.partialorder %v820, %v1025
        %vm1176 = vcmp.eq.f32.partialorder %v909, %v1025
        %vm1177 = vcmp.eq.f32.partialorder %v645, %v1030
        %vm1178 = vcmp.eq.f32.partialorder %v734, %v1030
        %vm1179 = vcmp.eq.f32.partialorder %v823, %v1030
        %vm1180 = vcmp.eq.f32.partialorder %v912, %v1030
        %vm1181 = vcmp.eq.f32.partialorder %v647, %v1035
        %vm1182 = vcmp.eq.f32.partialorder %v736, %v1035
        %vm1183 = vcmp.eq.f32.partialorder %v825, %v1035
        %vm1184 = vcmp.eq.f32.partialorder %v914, %v1035
        %vm1185 = vcmp.eq.f32.partialorder %v650, %v1040
        %vm1186 = vcmp.eq.f32.partialorder %v739, %v1040
        %vm1187 = vcmp.eq.f32.partialorder %v828, %v1040
        %vm1188 = vcmp.eq.f32.partialorder %v917, %v1040
        %vm1189 = vcmp.eq.f32.partialorder %v652, %v1045
        %vm1190 = vcmp.eq.f32.partialorder %v741, %v1045
        %vm1191 = vcmp.eq.f32.partialorder %v830, %v1045
        %vm1192 = vcmp.eq.f32.partialorder %v919, %v1045
        %vm1193 = vcmp.eq.f32.partialorder %v655, %v1050
        %vm1194 = vcmp.eq.f32.partialorder %v744, %v1050
        %vm1195 = vcmp.eq.f32.partialorder %v833, %v1050
        %vm1196 = vcmp.eq.f32.partialorder %v922, %v1050
        %vm1197 = vcmp.eq.f32.partialorder %v657, %v1055
        %vm1198 = vcmp.eq.f32.partialorder %v746, %v1055
        %vm1199 = vcmp.eq.f32.partialorder %v835, %v1055
        %vm1200 = vcmp.eq.f32.partialorder %v924, %v1055
        %vm1201 = vcmp.eq.f32.partialorder %v660, %v1060
        %vm1202 = vcmp.eq.f32.partialorder %v749, %v1060
        %vm1203 = vcmp.eq.f32.partialorder %v838, %v1060
        %vm1204 = vcmp.eq.f32.partialorder %v927, %v1060
        %vm1205 = vcmp.eq.f32.partialorder %v662, %v1065
        %vm1206 = vcmp.eq.f32.partialorder %v751, %v1065
        %vm1207 = vcmp.eq.f32.partialorder %v840, %v1065
        %vm1208 = vcmp.eq.f32.partialorder %v929, %v1065
        %vm1209 = vcmp.eq.f32.partialorder %v665, %v1070
        %vm1210 = vcmp.eq.f32.partialorder %v754, %v1070
        %vm1211 = vcmp.eq.f32.partialorder %v843, %v1070
        %vm1212 = vcmp.eq.f32.partialorder %v932, %v1070
        %vm1213 = vcmp.eq.f32.partialorder %v667, %v1075
        %vm1214 = vcmp.eq.f32.partialorder %v756, %v1075
        %vm1215 = vcmp.eq.f32.partialorder %v845, %v1075
        %vm1216 = vcmp.eq.f32.partialorder %v934, %v1075
        %vm1217 = vcmp.eq.f32.partialorder %v670, %v1080
        %vm1218 = vcmp.eq.f32.partialorder %v759, %v1080
        %vm1219 = vcmp.eq.f32.partialorder %v848, %v1080
        %vm1220 = vcmp.eq.f32.partialorder %v937, %v1080
        %vm1221 = vcmp.eq.f32.partialorder %v672, %v1085
        %vm1222 = vcmp.eq.f32.partialorder %v761, %v1085
        %vm1223 = vcmp.eq.f32.partialorder %v850, %v1085
        %vm1224 = vcmp.eq.f32.partialorder %v939, %v1085
        %vm1225 = vcmp.eq.f32.partialorder %v675, %v1090
        %vm1226 = vcmp.eq.f32.partialorder %v764, %v1090
        %vm1227 = vcmp.eq.f32.partialorder %v853, %v1090
        %vm1228 = vcmp.eq.f32.partialorder %v942, %v1090
        %vm1229 = vcmp.eq.f32.partialorder %v677, %v1095
        %vm1230 = vcmp.eq.f32.partialorder %v766, %v1095
        %vm1231 = vcmp.eq.f32.partialorder %v855, %v1095
        %vm1232 = vcmp.eq.f32.partialorder %v944, %v1095
        %vm1233 = vcmp.eq.f32.partialorder %v680, %v1100
        %vm1234 = vcmp.eq.f32.partialorder %v769, %v1100
        %vm1235 = vcmp.eq.f32.partialorder %v858, %v1100
        %vm1236 = vcmp.eq.f32.partialorder %v947, %v1100
        %vm1237 = vcmp.eq.f32.partialorder %v682, %v1105
        %vm1238 = vcmp.eq.f32.partialorder %v771, %v1105
        %vm1239 = vcmp.eq.f32.partialorder %v860, %v1105
        %vm1240 = vcmp.eq.f32.partialorder %v949, %v1105
        %vm1241 = vcmp.eq.f32.partialorder %v685, %v1110
        %vm1242 = vcmp.eq.f32.partialorder %v774, %v1110
        %vm1243 = vcmp.eq.f32.partialorder %v863, %v1110
        %vm1244 = vcmp.eq.f32.partialorder %v952, %v1110
        %vm1245 = vcmp.eq.f32.partialorder %v687, %v1115
        %vm1246 = vcmp.eq.f32.partialorder %v776, %v1115
        %vm1247 = vcmp.eq.f32.partialorder %v865, %v1115
        %vm1248 = vcmp.eq.f32.partialorder %v954, %v1115
        %v1249 = vsel %vm1121, %v1117, 512
        %v1250 = vsel %vm1122, %v1118, 512
        %v1251 = vsel %vm1123, %v1119, 512
        %v1252 = vsel %vm1124, %v1120, 512
        %v1253 = vsel %vm1125, %v1117, 512
        %v1254 = vsel %vm1126, %v1118, 512
        %v1255 = vsel %vm1127, %v1119, 512
        %v1256 = vsel %vm1128, %v1120, 512
        %v1257 = vsel %vm1129, %v1117, 512
        %v1258 = vsel %vm1130, %v1118, 512
        %v1259 = vsel %vm1131, %v1119, 512
        %v1260 = vsel %vm1132, %v1120, 512
        %v1261 = vsel %vm1133, %v1117, 512
        %v1262 = vsel %vm1134, %v1118, 512
        %v1263 = vsel %vm1135, %v1119, 512
        %v1264 = vsel %vm1136, %v1120, 512
        %v1265 = vsel %vm1137, %v1117, 512
        %v1266 = vsel %vm1138, %v1118, 512
        %v1267 = vsel %vm1139, %v1119, 512
        %v1268 = vsel %vm1140, %v1120, 512
        %v1269 = vsel %vm1141, %v1117, 512
        %v1270 = vsel %vm1142, %v1118, 512
        %v1271 = vsel %vm1143, %v1119, 512
        %v1272 = vsel %vm1144, %v1120, 512
        %v1273 = vsel %vm1145, %v1117, 512
        %v1274 = vsel %vm1146, %v1118, 512
        %v1275 = vsel %vm1147, %v1119, 512
        %v1276 = vsel %vm1148, %v1120, 512
        %v1277 = vsel %vm1149, %v1117, 512
        %v1278 = vsel %vm1150, %v1118, 512
        %v1279 = vsel %vm1151, %v1119, 512
        %v1280 = vsel %vm1152, %v1120, 512
        %v1281 = vsel %vm1153, %v1117, 512
        %v1282 = vsel %vm1154, %v1118, 512
        %v1283 = vsel %vm1155, %v1119, 512
        %v1284 = vsel %vm1156, %v1120, 512
        %v1285 = vsel %vm1157, %v1117, 512
        %v1286 = vsel %vm1158, %v1118, 512
        %v1287 = vsel %vm1159, %v1119, 512
        %v1288 = vsel %vm1160, %v1120, 512
        %v1289 = vsel %vm1161, %v1117, 512
        %v1290 = vsel %vm1162, %v1118, 512
        %v1291 = vsel %vm1163, %v1119, 512
        %v1292 = vsel %vm1164, %v1120, 512
        %v1293 = vsel %vm1165, %v1117, 512
        %v1294 = vsel %vm1166, %v1118, 512
        %v1295 = vsel %vm1167, %v1119, 512
        %v1296 = vsel %vm1168, %v1120, 512
        %v1297 = vsel %vm1169, %v1117, 512
        %v1298 = vsel %vm1170, %v1118, 512
        %v1299 = vsel %vm1171, %v1119, 512
        %v1300 = vsel %vm1172, %v1120, 512
        %v1301 = vsel %vm1173, %v1117, 512
        %v1302 = vsel %vm1174, %v1118, 512
        %v1303 = vsel %vm1175, %v1119, 512
        %v1304 = vsel %vm1176, %v1120, 512
        %v1305 = vsel %vm1177, %v1117, 512
        %v1306 = vsel %vm1178, %v1118, 512
        %v1307 = vsel %vm1179, %v1119, 512
        %v1308 = vsel %vm1180, %v1120, 512
        %v1309 = vsel %vm1181, %v1117, 512
        %v1310 = vsel %vm1182, %v1118, 512
        %v1311 = vsel %vm1183, %v1119, 512
        %v1312 = vsel %vm1184, %v1120, 512
        %v1313 = vsel %vm1185, %v1117, 512
        %v1314 = vsel %vm1186, %v1118, 512
        %v1315 = vsel %vm1187, %v1119, 512
        %v1316 = vsel %vm1188, %v1120, 512
        %v1317 = vsel %vm1189, %v1117, 512
        %v1318 = vsel %vm1190, %v1118, 512
        %v1319 = vsel %vm1191, %v1119, 512
        %v1320 = vsel %vm1192, %v1120, 512
        %v1321 = vsel %vm1193, %v1117, 512
        %v1322 = vsel %vm1194, %v1118, 512
        %v1323 = vsel %vm1195, %v1119, 512
        %v1324 = vsel %vm1196, %v1120, 512
        %v1325 = vsel %vm1197, %v1117, 512
        %v1326 = vsel %vm1198, %v1118, 512
        %v1327 = vsel %vm1199, %v1119, 512
        %v1328 = vsel %vm1200, %v1120, 512
        %v1329 = vsel %vm1201, %v1117, 512
        %v1330 = vsel %vm1202, %v1118, 512
        %v1331 = vsel %vm1203, %v1119, 512
        %v1332 = vsel %vm1204, %v1120, 512
        %v1333 = vsel %vm1205, %v1117, 512
        %v1334 = vsel %vm1206, %v1118, 512
        %v1335 = vsel %vm1207, %v1119, 512
        %v1336 = vsel %vm1208, %v1120, 512
        %v1337 = vsel %vm1209, %v1117, 512
        %v1338 = vsel %vm1210, %v1118, 512
        %v1339 = vsel %vm1211, %v1119, 512
        %v1340 = vsel %vm1212, %v1120, 512
        %v1341 = vsel %vm1213, %v1117, 512
        %v1342 = vsel %vm1214, %v1118, 512
        %v1343 = vsel %vm1215, %v1119, 512
        %v1344 = vsel %vm1216, %v1120, 512
        %v1345 = vsel %vm1217, %v1117, 512
        %v1346 = vsel %vm1218, %v1118, 512
        %v1347 = vsel %vm1219, %v1119, 512
        %v1348 = vsel %vm1220, %v1120, 512
        %v1349 = vsel %vm1221, %v1117, 512
        %v1350 = vsel %vm1222, %v1118, 512
        %v1351 = vsel %vm1223, %v1119, 512
        %v1352 = vsel %vm1224, %v1120, 512
        %v1353 = vsel %vm1225, %v1117, 512
        %v1354 = vsel %vm1226, %v1118, 512
        %v1355 = vsel %vm1227, %v1119, 512
        %v1356 = vsel %vm1228, %v1120, 512
        %v1357 = vsel %vm1229, %v1117, 512
        %v1358 = vsel %vm1230, %v1118, 512
        %v1359 = vsel %vm1231, %v1119, 512
        %v1360 = vsel %vm1232, %v1120, 512
        %v1361 = vsel %vm1233, %v1117, 512
        %v1362 = vsel %vm1234, %v1118, 512
        %v1363 = vsel %vm1235, %v1119, 512
        %v1364 = vsel %vm1236, %v1120, 512
        %v1365 = vsel %vm1237, %v1117, 512
        %v1366 = vsel %vm1238, %v1118, 512
        %v1367 = vsel %vm1239, %v1119, 512
        %v1368 = vsel %vm1240, %v1120, 512
        %v1369 = vsel %vm1241, %v1117, 512
        %v1370 = vsel %vm1242, %v1118, 512
        %v1371 = vsel %vm1243, %v1119, 512
        %v1372 = vsel %vm1244, %v1120, 512
        %v1373 = vsel %vm1245, %v1117, 512
        %v1374 = vsel %vm1246, %v1118, 512
        %v1375 = vsel %vm1247, %v1119, 512
        %v1376 = vsel %vm1248, %v1120, 512
        %vm1377 = vcmp.lt.s32.totalorder %v1249, %v1250
        %v1378 = vsel %vm1377, %v1249, %v1250
        %vm1379 = vcmp.lt.s32.totalorder %v1378, %v1251
        %v1380 = vsel %vm1379, %v1378, %v1251
        %vm1381 = vcmp.lt.s32.totalorder %v1380, %v1252
        %v1382 = vsel %vm1381, %v1380, %v1252
        %v1383 = vand.u32 %v1382, 65535
        %v1384 = vshra.s32 %v1382, 16
        %v1385 = vcvt.s32.f32 %v1383
        %v1386 = vcvt.s32.f32 %v1384
        %1387 = vmin.xlane.f32.xlu0 %v1386
        %v1388 = vpop.xlane.xlu0 %1387
        %vm1389 = vcmp.eq.f32.partialorder %v1386, %v1388
        %v1390 = vsel %vm1389, %v1385, inf
        %1391 = vmin.xlane.f32.xlu0 %v1390
        %v1392 = vpop.xlane.xlu0 %1391
        %v1393 = vcvt.f32.s32 %v1392
        %v1394 = vcvt.f32.s32 %v1388
        %v1395 = vshll.u32 %v1394, 16
        %v1396 = vadd.s32 %v1395, %v1393
        %vm1397 = vcmp.lt.s32.totalorder %v1253, %v1254
        %v1398 = vsel %vm1397, %v1253, %v1254
        %vm1399 = vcmp.lt.s32.totalorder %v1398, %v1255
        %v1400 = vsel %vm1399, %v1398, %v1255
        %vm1401 = vcmp.lt.s32.totalorder %v1400, %v1256
        %v1402 = vsel %vm1401, %v1400, %v1256
        %v1403 = vand.u32 %v1402, 65535
        %v1404 = vshra.s32 %v1402, 16
        %v1405 = vcvt.s32.f32 %v1403
        %v1406 = vcvt.s32.f32 %v1404
        %1407 = vmin.xlane.f32.xlu0 %v1406
        %v1408 = vpop.xlane.xlu0 %1407
        %vm1409 = vcmp.eq.f32.partialorder %v1406, %v1408
        %v1410 = vsel %vm1409, %v1405, inf
        %1411 = vmin.xlane.f32.xlu0 %v1410
        %v1412 = vpop.xlane.xlu0 %1411
        %v1413 = vcvt.f32.s32 %v1412
        %v1414 = vcvt.f32.s32 %v1408
        %v1415 = vshll.u32 %v1414, 16
        %v1416 = vadd.s32 %v1415, %v1413
        %vm1417 = vcmp.lt.s32.totalorder %v1257, %v1258
        %v1418 = vsel %vm1417, %v1257, %v1258
        %vm1419 = vcmp.lt.s32.totalorder %v1418, %v1259
        %v1420 = vsel %vm1419, %v1418, %v1259
        %vm1421 = vcmp.lt.s32.totalorder %v1420, %v1260
        %v1422 = vsel %vm1421, %v1420, %v1260
        %v1423 = vand.u32 %v1422, 65535
        %v1424 = vshra.s32 %v1422, 16
        %v1425 = vcvt.s32.f32 %v1423
        %v1426 = vcvt.s32.f32 %v1424
        %1427 = vmin.xlane.f32.xlu0 %v1426
        %v1428 = vpop.xlane.xlu0 %1427
        %vm1429 = vcmp.eq.f32.partialorder %v1426, %v1428
        %v1430 = vsel %vm1429, %v1425, inf
        %1431 = vmin.xlane.f32.xlu0 %v1430
        %v1432 = vpop.xlane.xlu0 %1431
        %v1433 = vcvt.f32.s32 %v1432
        %v1434 = vcvt.f32.s32 %v1428
        %v1435 = vshll.u32 %v1434, 16
        %v1436 = vadd.s32 %v1435, %v1433
        %vm1437 = vcmp.lt.s32.totalorder %v1261, %v1262
        %v1438 = vsel %vm1437, %v1261, %v1262
        %vm1439 = vcmp.lt.s32.totalorder %v1438, %v1263
        %v1440 = vsel %vm1439, %v1438, %v1263
        %vm1441 = vcmp.lt.s32.totalorder %v1440, %v1264
        %v1442 = vsel %vm1441, %v1440, %v1264
        %v1443 = vand.u32 %v1442, 65535
        %v1444 = vshra.s32 %v1442, 16
        %v1445 = vcvt.s32.f32 %v1443
        %v1446 = vcvt.s32.f32 %v1444
        %1447 = vmin.xlane.f32.xlu0 %v1446
        %v1448 = vpop.xlane.xlu0 %1447
        %vm1449 = vcmp.eq.f32.partialorder %v1446, %v1448
        %v1450 = vsel %vm1449, %v1445, inf
        %1451 = vmin.xlane.f32.xlu0 %v1450
        %v1452 = vpop.xlane.xlu0 %1451
        %v1453 = vcvt.f32.s32 %v1452
        %v1454 = vcvt.f32.s32 %v1448
        %v1455 = vshll.u32 %v1454, 16
        %v1456 = vadd.s32 %v1455, %v1453
        %vm1457 = vcmp.lt.s32.totalorder %v1265, %v1266
        %v1458 = vsel %vm1457, %v1265, %v1266
        %vm1459 = vcmp.lt.s32.totalorder %v1458, %v1267
        %v1460 = vsel %vm1459, %v1458, %v1267
        %vm1461 = vcmp.lt.s32.totalorder %v1460, %v1268
        %v1462 = vsel %vm1461, %v1460, %v1268
        %v1463 = vand.u32 %v1462, 65535
        %v1464 = vshra.s32 %v1462, 16
        %v1465 = vcvt.s32.f32 %v1463
        %v1466 = vcvt.s32.f32 %v1464
        %1467 = vmin.xlane.f32.xlu0 %v1466
        %v1468 = vpop.xlane.xlu0 %1467
        %vm1469 = vcmp.eq.f32.partialorder %v1466, %v1468
        %v1470 = vsel %vm1469, %v1465, inf
        %1471 = vmin.xlane.f32.xlu0 %v1470
        %v1472 = vpop.xlane.xlu0 %1471
        %v1473 = vcvt.f32.s32 %v1472
        %v1474 = vcvt.f32.s32 %v1468
        %v1475 = vshll.u32 %v1474, 16
        %v1476 = vadd.s32 %v1475, %v1473
        %vm1477 = vcmp.lt.s32.totalorder %v1269, %v1270
        %v1478 = vsel %vm1477, %v1269, %v1270
        %vm1479 = vcmp.lt.s32.totalorder %v1478, %v1271
        %v1480 = vsel %vm1479, %v1478, %v1271
        %vm1481 = vcmp.lt.s32.totalorder %v1480, %v1272
        %v1482 = vsel %vm1481, %v1480, %v1272
        %v1483 = vand.u32 %v1482, 65535
        %v1484 = vshra.s32 %v1482, 16
        %v1485 = vcvt.s32.f32 %v1483
        %v1486 = vcvt.s32.f32 %v1484
        %1487 = vmin.xlane.f32.xlu0 %v1486
        %v1488 = vpop.xlane.xlu0 %1487
        %vm1489 = vcmp.eq.f32.partialorder %v1486, %v1488
        %v1490 = vsel %vm1489, %v1485, inf
        %1491 = vmin.xlane.f32.xlu0 %v1490
        %v1492 = vpop.xlane.xlu0 %1491
        %v1493 = vcvt.f32.s32 %v1492
        %v1494 = vcvt.f32.s32 %v1488
        %v1495 = vshll.u32 %v1494, 16
        %v1496 = vadd.s32 %v1495, %v1493
        %vm1497 = vcmp.lt.s32.totalorder %v1273, %v1274
        %v1498 = vsel %vm1497, %v1273, %v1274
        %vm1499 = vcmp.lt.s32.totalorder %v1498, %v1275
        %v1500 = vsel %vm1499, %v1498, %v1275
        %vm1501 = vcmp.lt.s32.totalorder %v1500, %v1276
        %v1502 = vsel %vm1501, %v1500, %v1276
        %v1503 = vand.u32 %v1502, 65535
        %v1504 = vshra.s32 %v1502, 16
        %v1505 = vcvt.s32.f32 %v1503
        %v1506 = vcvt.s32.f32 %v1504
        %1507 = vmin.xlane.f32.xlu0 %v1506
        %v1508 = vpop.xlane.xlu0 %1507
        %vm1509 = vcmp.eq.f32.partialorder %v1506, %v1508
        %v1510 = vsel %vm1509, %v1505, inf
        %1511 = vmin.xlane.f32.xlu0 %v1510
        %v1512 = vpop.xlane.xlu0 %1511
        %v1513 = vcvt.f32.s32 %v1512
        %v1514 = vcvt.f32.s32 %v1508
        %v1515 = vshll.u32 %v1514, 16
        %v1516 = vadd.s32 %v1515, %v1513
        %vm1517 = vcmp.lt.s32.totalorder %v1277, %v1278
        %v1518 = vsel %vm1517, %v1277, %v1278
        %vm1519 = vcmp.lt.s32.totalorder %v1518, %v1279
        %v1520 = vsel %vm1519, %v1518, %v1279
        %vm1521 = vcmp.lt.s32.totalorder %v1520, %v1280
        %v1522 = vsel %vm1521, %v1520, %v1280
        %v1523 = vand.u32 %v1522, 65535
        %v1524 = vshra.s32 %v1522, 16
        %v1525 = vcvt.s32.f32 %v1523
        %v1526 = vcvt.s32.f32 %v1524
        %1527 = vmin.xlane.f32.xlu0 %v1526
        %v1528 = vpop.xlane.xlu0 %1527
        %vm1529 = vcmp.eq.f32.partialorder %v1526, %v1528
        %v1530 = vsel %vm1529, %v1525, inf
        %1531 = vmin.xlane.f32.xlu0 %v1530
        %v1532 = vpop.xlane.xlu0 %1531
        %v1533 = vcvt.f32.s32 %v1532
        %v1534 = vcvt.f32.s32 %v1528
        %v1535 = vshll.u32 %v1534, 16
        %v1536 = vadd.s32 %v1535, %v1533
        %vm1537 = vcmp.lt.s32.totalorder %v1281, %v1282
        %v1538 = vsel %vm1537, %v1281, %v1282
        %vm1539 = vcmp.lt.s32.totalorder %v1538, %v1283
        %v1540 = vsel %vm1539, %v1538, %v1283
        %vm1541 = vcmp.lt.s32.totalorder %v1540, %v1284
        %v1542 = vsel %vm1541, %v1540, %v1284
        %v1543 = vand.u32 %v1542, 65535
        %v1544 = vshra.s32 %v1542, 16
        %v1545 = vcvt.s32.f32 %v1543
        %v1546 = vcvt.s32.f32 %v1544
        %1547 = vmin.xlane.f32.xlu0 %v1546
        %v1548 = vpop.xlane.xlu0 %1547
        %vm1549 = vcmp.eq.f32.partialorder %v1546, %v1548
        %v1550 = vsel %vm1549, %v1545, inf
        %1551 = vmin.xlane.f32.xlu0 %v1550
        %v1552 = vpop.xlane.xlu0 %1551
        %v1553 = vcvt.f32.s32 %v1552
        %v1554 = vcvt.f32.s32 %v1548
        %v1555 = vshll.u32 %v1554, 16
        %v1556 = vadd.s32 %v1555, %v1553
        %vm1557 = vcmp.lt.s32.totalorder %v1285, %v1286
        %v1558 = vsel %vm1557, %v1285, %v1286
        %vm1559 = vcmp.lt.s32.totalorder %v1558, %v1287
        %v1560 = vsel %vm1559, %v1558, %v1287
        %vm1561 = vcmp.lt.s32.totalorder %v1560, %v1288
        %v1562 = vsel %vm1561, %v1560, %v1288
        %v1563 = vand.u32 %v1562, 65535
        %v1564 = vshra.s32 %v1562, 16
        %v1565 = vcvt.s32.f32 %v1563
        %v1566 = vcvt.s32.f32 %v1564
        %1567 = vmin.xlane.f32.xlu0 %v1566
        %v1568 = vpop.xlane.xlu0 %1567
        %vm1569 = vcmp.eq.f32.partialorder %v1566, %v1568
        %v1570 = vsel %vm1569, %v1565, inf
        %1571 = vmin.xlane.f32.xlu0 %v1570
        %v1572 = vpop.xlane.xlu0 %1571
        %v1573 = vcvt.f32.s32 %v1572
        %v1574 = vcvt.f32.s32 %v1568
        %v1575 = vshll.u32 %v1574, 16
        %v1576 = vadd.s32 %v1575, %v1573
        %vm1577 = vcmp.lt.s32.totalorder %v1289, %v1290
        %v1578 = vsel %vm1577, %v1289, %v1290
        %vm1579 = vcmp.lt.s32.totalorder %v1578, %v1291
        %v1580 = vsel %vm1579, %v1578, %v1291
        %vm1581 = vcmp.lt.s32.totalorder %v1580, %v1292
        %v1582 = vsel %vm1581, %v1580, %v1292
        %v1583 = vand.u32 %v1582, 65535
        %v1584 = vshra.s32 %v1582, 16
        %v1585 = vcvt.s32.f32 %v1583
        %v1586 = vcvt.s32.f32 %v1584
        %1587 = vmin.xlane.f32.xlu0 %v1586
        %v1588 = vpop.xlane.xlu0 %1587
        %vm1589 = vcmp.eq.f32.partialorder %v1586, %v1588
        %v1590 = vsel %vm1589, %v1585, inf
        %1591 = vmin.xlane.f32.xlu0 %v1590
        %v1592 = vpop.xlane.xlu0 %1591
        %v1593 = vcvt.f32.s32 %v1592
        %v1594 = vcvt.f32.s32 %v1588
        %v1595 = vshll.u32 %v1594, 16
        %v1596 = vadd.s32 %v1595, %v1593
        %vm1597 = vcmp.lt.s32.totalorder %v1293, %v1294
        %v1598 = vsel %vm1597, %v1293, %v1294
        %vm1599 = vcmp.lt.s32.totalorder %v1598, %v1295
        %v1600 = vsel %vm1599, %v1598, %v1295
        %vm1601 = vcmp.lt.s32.totalorder %v1600, %v1296
        %v1602 = vsel %vm1601, %v1600, %v1296
        %v1603 = vand.u32 %v1602, 65535
        %v1604 = vshra.s32 %v1602, 16
        %v1605 = vcvt.s32.f32 %v1603
        %v1606 = vcvt.s32.f32 %v1604
        %1607 = vmin.xlane.f32.xlu0 %v1606
        %v1608 = vpop.xlane.xlu0 %1607
        %vm1609 = vcmp.eq.f32.partialorder %v1606, %v1608
        %v1610 = vsel %vm1609, %v1605, inf
        %1611 = vmin.xlane.f32.xlu0 %v1610
        %v1612 = vpop.xlane.xlu0 %1611
        %v1613 = vcvt.f32.s32 %v1612
        %v1614 = vcvt.f32.s32 %v1608
        %v1615 = vshll.u32 %v1614, 16
        %v1616 = vadd.s32 %v1615, %v1613
        %vm1617 = vcmp.lt.s32.totalorder %v1297, %v1298
        %v1618 = vsel %vm1617, %v1297, %v1298
        %vm1619 = vcmp.lt.s32.totalorder %v1618, %v1299
        %v1620 = vsel %vm1619, %v1618, %v1299
        %vm1621 = vcmp.lt.s32.totalorder %v1620, %v1300
        %v1622 = vsel %vm1621, %v1620, %v1300
        %v1623 = vand.u32 %v1622, 65535
        %v1624 = vshra.s32 %v1622, 16
        %v1625 = vcvt.s32.f32 %v1623
        %v1626 = vcvt.s32.f32 %v1624
        %1627 = vmin.xlane.f32.xlu0 %v1626
        %v1628 = vpop.xlane.xlu0 %1627
        %vm1629 = vcmp.eq.f32.partialorder %v1626, %v1628
        %v1630 = vsel %vm1629, %v1625, inf
        %1631 = vmin.xlane.f32.xlu0 %v1630
        %v1632 = vpop.xlane.xlu0 %1631
        %v1633 = vcvt.f32.s32 %v1632
        %v1634 = vcvt.f32.s32 %v1628
        %v1635 = vshll.u32 %v1634, 16
        %v1636 = vadd.s32 %v1635, %v1633
        %vm1637 = vcmp.lt.s32.totalorder %v1301, %v1302
        %v1638 = vsel %vm1637, %v1301, %v1302
        %vm1639 = vcmp.lt.s32.totalorder %v1638, %v1303
        %v1640 = vsel %vm1639, %v1638, %v1303
        %vm1641 = vcmp.lt.s32.totalorder %v1640, %v1304
        %v1642 = vsel %vm1641, %v1640, %v1304
        %v1643 = vand.u32 %v1642, 65535
        %v1644 = vshra.s32 %v1642, 16
        %v1645 = vcvt.s32.f32 %v1643
        %v1646 = vcvt.s32.f32 %v1644
        %1647 = vmin.xlane.f32.xlu0 %v1646
        %v1648 = vpop.xlane.xlu0 %1647
        %vm1649 = vcmp.eq.f32.partialorder %v1646, %v1648
        %v1650 = vsel %vm1649, %v1645, inf
        %1651 = vmin.xlane.f32.xlu0 %v1650
        %v1652 = vpop.xlane.xlu0 %1651
        %v1653 = vcvt.f32.s32 %v1652
        %v1654 = vcvt.f32.s32 %v1648
        %v1655 = vshll.u32 %v1654, 16
        %v1656 = vadd.s32 %v1655, %v1653
        %vm1657 = vcmp.lt.s32.totalorder %v1305, %v1306
        %v1658 = vsel %vm1657, %v1305, %v1306
        %vm1659 = vcmp.lt.s32.totalorder %v1658, %v1307
        %v1660 = vsel %vm1659, %v1658, %v1307
        %vm1661 = vcmp.lt.s32.totalorder %v1660, %v1308
        %v1662 = vsel %vm1661, %v1660, %v1308
        %v1663 = vand.u32 %v1662, 65535
        %v1664 = vshra.s32 %v1662, 16
        %v1665 = vcvt.s32.f32 %v1663
        %v1666 = vcvt.s32.f32 %v1664
        %1667 = vmin.xlane.f32.xlu0 %v1666
        %v1668 = vpop.xlane.xlu0 %1667
        %vm1669 = vcmp.eq.f32.partialorder %v1666, %v1668
        %v1670 = vsel %vm1669, %v1665, inf
        %1671 = vmin.xlane.f32.xlu0 %v1670
        %v1672 = vpop.xlane.xlu0 %1671
        %v1673 = vcvt.f32.s32 %v1672
        %v1674 = vcvt.f32.s32 %v1668
        %v1675 = vshll.u32 %v1674, 16
        %v1676 = vadd.s32 %v1675, %v1673
        %vm1677 = vcmp.lt.s32.totalorder %v1309, %v1310
        %v1678 = vsel %vm1677, %v1309, %v1310
        %vm1679 = vcmp.lt.s32.totalorder %v1678, %v1311
        %v1680 = vsel %vm1679, %v1678, %v1311
        %vm1681 = vcmp.lt.s32.totalorder %v1680, %v1312
        %v1682 = vsel %vm1681, %v1680, %v1312
        %v1683 = vand.u32 %v1682, 65535
        %v1684 = vshra.s32 %v1682, 16
        %v1685 = vcvt.s32.f32 %v1683
        %v1686 = vcvt.s32.f32 %v1684
        %1687 = vmin.xlane.f32.xlu0 %v1686
        %v1688 = vpop.xlane.xlu0 %1687
        %vm1689 = vcmp.eq.f32.partialorder %v1686, %v1688
        %v1690 = vsel %vm1689, %v1685, inf
        %1691 = vmin.xlane.f32.xlu0 %v1690
        %v1692 = vpop.xlane.xlu0 %1691
        %v1693 = vcvt.f32.s32 %v1692
        %v1694 = vcvt.f32.s32 %v1688
        %v1695 = vshll.u32 %v1694, 16
        %v1696 = vadd.s32 %v1695, %v1693
        %vm1697 = vcmp.lt.s32.totalorder %v1313, %v1314
        %v1698 = vsel %vm1697, %v1313, %v1314
        %vm1699 = vcmp.lt.s32.totalorder %v1698, %v1315
        %v1700 = vsel %vm1699, %v1698, %v1315
        %vm1701 = vcmp.lt.s32.totalorder %v1700, %v1316
        %v1702 = vsel %vm1701, %v1700, %v1316
        %v1703 = vand.u32 %v1702, 65535
        %v1704 = vshra.s32 %v1702, 16
        %v1705 = vcvt.s32.f32 %v1703
        %v1706 = vcvt.s32.f32 %v1704
        %1707 = vmin.xlane.f32.xlu0 %v1706
        %v1708 = vpop.xlane.xlu0 %1707
        %vm1709 = vcmp.eq.f32.partialorder %v1706, %v1708
        %v1710 = vsel %vm1709, %v1705, inf
        %1711 = vmin.xlane.f32.xlu0 %v1710
        %v1712 = vpop.xlane.xlu0 %1711
        %v1713 = vcvt.f32.s32 %v1712
        %v1714 = vcvt.f32.s32 %v1708
        %v1715 = vshll.u32 %v1714, 16
        %v1716 = vadd.s32 %v1715, %v1713
        %vm1717 = vcmp.lt.s32.totalorder %v1317, %v1318
        %v1718 = vsel %vm1717, %v1317, %v1318
        %vm1719 = vcmp.lt.s32.totalorder %v1718, %v1319
        %v1720 = vsel %vm1719, %v1718, %v1319
        %vm1721 = vcmp.lt.s32.totalorder %v1720, %v1320
        %v1722 = vsel %vm1721, %v1720, %v1320
        %v1723 = vand.u32 %v1722, 65535
        %v1724 = vshra.s32 %v1722, 16
        %v1725 = vcvt.s32.f32 %v1723
        %v1726 = vcvt.s32.f32 %v1724
        %1727 = vmin.xlane.f32.xlu0 %v1726
        %v1728 = vpop.xlane.xlu0 %1727
        %vm1729 = vcmp.eq.f32.partialorder %v1726, %v1728
        %v1730 = vsel %vm1729, %v1725, inf
        %1731 = vmin.xlane.f32.xlu0 %v1730
        %v1732 = vpop.xlane.xlu0 %1731
        %v1733 = vcvt.f32.s32 %v1732
        %v1734 = vcvt.f32.s32 %v1728
        %v1735 = vshll.u32 %v1734, 16
        %v1736 = vadd.s32 %v1735, %v1733
        %vm1737 = vcmp.lt.s32.totalorder %v1321, %v1322
        %v1738 = vsel %vm1737, %v1321, %v1322
        %vm1739 = vcmp.lt.s32.totalorder %v1738, %v1323
        %v1740 = vsel %vm1739, %v1738, %v1323
        %vm1741 = vcmp.lt.s32.totalorder %v1740, %v1324
        %v1742 = vsel %vm1741, %v1740, %v1324
        %v1743 = vand.u32 %v1742, 65535
        %v1744 = vshra.s32 %v1742, 16
        %v1745 = vcvt.s32.f32 %v1743
        %v1746 = vcvt.s32.f32 %v1744
        %1747 = vmin.xlane.f32.xlu0 %v1746
        %v1748 = vpop.xlane.xlu0 %1747
        %vm1749 = vcmp.eq.f32.partialorder %v1746, %v1748
        %v1750 = vsel %vm1749, %v1745, inf
        %1751 = vmin.xlane.f32.xlu0 %v1750
        %v1752 = vpop.xlane.xlu0 %1751
        %v1753 = vcvt.f32.s32 %v1752
        %v1754 = vcvt.f32.s32 %v1748
        %v1755 = vshll.u32 %v1754, 16
        %v1756 = vadd.s32 %v1755, %v1753
        %vm1757 = vcmp.lt.s32.totalorder %v1325, %v1326
        %v1758 = vsel %vm1757, %v1325, %v1326
        %vm1759 = vcmp.lt.s32.totalorder %v1758, %v1327
        %v1760 = vsel %vm1759, %v1758, %v1327
        %vm1761 = vcmp.lt.s32.totalorder %v1760, %v1328
        %v1762 = vsel %vm1761, %v1760, %v1328
        %v1763 = vand.u32 %v1762, 65535
        %v1764 = vshra.s32 %v1762, 16
        %v1765 = vcvt.s32.f32 %v1763
        %v1766 = vcvt.s32.f32 %v1764
        %1767 = vmin.xlane.f32.xlu0 %v1766
        %v1768 = vpop.xlane.xlu0 %1767
        %vm1769 = vcmp.eq.f32.partialorder %v1766, %v1768
        %v1770 = vsel %vm1769, %v1765, inf
        %1771 = vmin.xlane.f32.xlu0 %v1770
        %v1772 = vpop.xlane.xlu0 %1771
        %v1773 = vcvt.f32.s32 %v1772
        %v1774 = vcvt.f32.s32 %v1768
        %v1775 = vshll.u32 %v1774, 16
        %v1776 = vadd.s32 %v1775, %v1773
        %vm1777 = vcmp.lt.s32.totalorder %v1329, %v1330
        %v1778 = vsel %vm1777, %v1329, %v1330
        %vm1779 = vcmp.lt.s32.totalorder %v1778, %v1331
        %v1780 = vsel %vm1779, %v1778, %v1331
        %vm1781 = vcmp.lt.s32.totalorder %v1780, %v1332
        %v1782 = vsel %vm1781, %v1780, %v1332
        %v1783 = vand.u32 %v1782, 65535
        %v1784 = vshra.s32 %v1782, 16
        %v1785 = vcvt.s32.f32 %v1783
        %v1786 = vcvt.s32.f32 %v1784
        %1787 = vmin.xlane.f32.xlu0 %v1786
        %v1788 = vpop.xlane.xlu0 %1787
        %vm1789 = vcmp.eq.f32.partialorder %v1786, %v1788
        %v1790 = vsel %vm1789, %v1785, inf
        %1791 = vmin.xlane.f32.xlu0 %v1790
        %v1792 = vpop.xlane.xlu0 %1791
        %v1793 = vcvt.f32.s32 %v1792
        %v1794 = vcvt.f32.s32 %v1788
        %v1795 = vshll.u32 %v1794, 16
        %v1796 = vadd.s32 %v1795, %v1793
        %vm1797 = vcmp.lt.s32.totalorder %v1333, %v1334
        %v1798 = vsel %vm1797, %v1333, %v1334
        %vm1799 = vcmp.lt.s32.totalorder %v1798, %v1335
        %v1800 = vsel %vm1799, %v1798, %v1335
        %vm1801 = vcmp.lt.s32.totalorder %v1800, %v1336
        %v1802 = vsel %vm1801, %v1800, %v1336
        %v1803 = vand.u32 %v1802, 65535
        %v1804 = vshra.s32 %v1802, 16
        %v1805 = vcvt.s32.f32 %v1803
        %v1806 = vcvt.s32.f32 %v1804
        %1807 = vmin.xlane.f32.xlu0 %v1806
        %v1808 = vpop.xlane.xlu0 %1807
        %vm1809 = vcmp.eq.f32.partialorder %v1806, %v1808
        %v1810 = vsel %vm1809, %v1805, inf
        %1811 = vmin.xlane.f32.xlu0 %v1810
        %v1812 = vpop.xlane.xlu0 %1811
        %v1813 = vcvt.f32.s32 %v1812
        %v1814 = vcvt.f32.s32 %v1808
        %v1815 = vshll.u32 %v1814, 16
        %v1816 = vadd.s32 %v1815, %v1813
        %vm1817 = vcmp.lt.s32.totalorder %v1337, %v1338
        %v1818 = vsel %vm1817, %v1337, %v1338
        %vm1819 = vcmp.lt.s32.totalorder %v1818, %v1339
        %v1820 = vsel %vm1819, %v1818, %v1339
        %vm1821 = vcmp.lt.s32.totalorder %v1820, %v1340
        %v1822 = vsel %vm1821, %v1820, %v1340
        %v1823 = vand.u32 %v1822, 65535
        %v1824 = vshra.s32 %v1822, 16
        %v1825 = vcvt.s32.f32 %v1823
        %v1826 = vcvt.s32.f32 %v1824
        %1827 = vmin.xlane.f32.xlu0 %v1826
        %v1828 = vpop.xlane.xlu0 %1827
        %vm1829 = vcmp.eq.f32.partialorder %v1826, %v1828
        %v1830 = vsel %vm1829, %v1825, inf
        %1831 = vmin.xlane.f32.xlu0 %v1830
        %v1832 = vpop.xlane.xlu0 %1831
        %v1833 = vcvt.f32.s32 %v1832
        %v1834 = vcvt.f32.s32 %v1828
        %v1835 = vshll.u32 %v1834, 16
        %v1836 = vadd.s32 %v1835, %v1833
        %vm1837 = vcmp.lt.s32.totalorder %v1341, %v1342
        %v1838 = vsel %vm1837, %v1341, %v1342
        %vm1839 = vcmp.lt.s32.totalorder %v1838, %v1343
        %v1840 = vsel %vm1839, %v1838, %v1343
        %vm1841 = vcmp.lt.s32.totalorder %v1840, %v1344
        %v1842 = vsel %vm1841, %v1840, %v1344
        %v1843 = vand.u32 %v1842, 65535
        %v1844 = vshra.s32 %v1842, 16
        %v1845 = vcvt.s32.f32 %v1843
        %v1846 = vcvt.s32.f32 %v1844
        %1847 = vmin.xlane.f32.xlu0 %v1846
        %v1848 = vpop.xlane.xlu0 %1847
        %vm1849 = vcmp.eq.f32.partialorder %v1846, %v1848
        %v1850 = vsel %vm1849, %v1845, inf
        %1851 = vmin.xlane.f32.xlu0 %v1850
        %v1852 = vpop.xlane.xlu0 %1851
        %v1853 = vcvt.f32.s32 %v1852
        %v1854 = vcvt.f32.s32 %v1848
        %v1855 = vshll.u32 %v1854, 16
        %v1856 = vadd.s32 %v1855, %v1853
        %vm1857 = vcmp.lt.s32.totalorder %v1345, %v1346
        %v1858 = vsel %vm1857, %v1345, %v1346
        %vm1859 = vcmp.lt.s32.totalorder %v1858, %v1347
        %v1860 = vsel %vm1859, %v1858, %v1347
        %vm1861 = vcmp.lt.s32.totalorder %v1860, %v1348
        %v1862 = vsel %vm1861, %v1860, %v1348
        %v1863 = vand.u32 %v1862, 65535
        %v1864 = vshra.s32 %v1862, 16
        %v1865 = vcvt.s32.f32 %v1863
        %v1866 = vcvt.s32.f32 %v1864
        %1867 = vmin.xlane.f32.xlu0 %v1866
        %v1868 = vpop.xlane.xlu0 %1867
        %vm1869 = vcmp.eq.f32.partialorder %v1866, %v1868
        %v1870 = vsel %vm1869, %v1865, inf
        %1871 = vmin.xlane.f32.xlu0 %v1870
        %v1872 = vpop.xlane.xlu0 %1871
        %v1873 = vcvt.f32.s32 %v1872
        %v1874 = vcvt.f32.s32 %v1868
        %v1875 = vshll.u32 %v1874, 16
        %v1876 = vadd.s32 %v1875, %v1873
        %vm1877 = vcmp.lt.s32.totalorder %v1349, %v1350
        %v1878 = vsel %vm1877, %v1349, %v1350
        %vm1879 = vcmp.lt.s32.totalorder %v1878, %v1351
        %v1880 = vsel %vm1879, %v1878, %v1351
        %vm1881 = vcmp.lt.s32.totalorder %v1880, %v1352
        %v1882 = vsel %vm1881, %v1880, %v1352
        %v1883 = vand.u32 %v1882, 65535
        %v1884 = vshra.s32 %v1882, 16
        %v1885 = vcvt.s32.f32 %v1883
        %v1886 = vcvt.s32.f32 %v1884
        %1887 = vmin.xlane.f32.xlu0 %v1886
        %v1888 = vpop.xlane.xlu0 %1887
        %vm1889 = vcmp.eq.f32.partialorder %v1886, %v1888
        %v1890 = vsel %vm1889, %v1885, inf
        %1891 = vmin.xlane.f32.xlu0 %v1890
        %v1892 = vpop.xlane.xlu0 %1891
        %v1893 = vcvt.f32.s32 %v1892
        %v1894 = vcvt.f32.s32 %v1888
        %v1895 = vshll.u32 %v1894, 16
        %v1896 = vadd.s32 %v1895, %v1893
        %vm1897 = vcmp.lt.s32.totalorder %v1353, %v1354
        %v1898 = vsel %vm1897, %v1353, %v1354
        %vm1899 = vcmp.lt.s32.totalorder %v1898, %v1355
        %v1900 = vsel %vm1899, %v1898, %v1355
        %vm1901 = vcmp.lt.s32.totalorder %v1900, %v1356
        %v1902 = vsel %vm1901, %v1900, %v1356
        %v1903 = vand.u32 %v1902, 65535
        %v1904 = vshra.s32 %v1902, 16
        %v1905 = vcvt.s32.f32 %v1903
        %v1906 = vcvt.s32.f32 %v1904
        %1907 = vmin.xlane.f32.xlu0 %v1906
        %v1908 = vpop.xlane.xlu0 %1907
        %vm1909 = vcmp.eq.f32.partialorder %v1906, %v1908
        %v1910 = vsel %vm1909, %v1905, inf
        %1911 = vmin.xlane.f32.xlu0 %v1910
        %v1912 = vpop.xlane.xlu0 %1911
        %v1913 = vcvt.f32.s32 %v1912
        %v1914 = vcvt.f32.s32 %v1908
        %v1915 = vshll.u32 %v1914, 16
        %v1916 = vadd.s32 %v1915, %v1913
        %vm1917 = vcmp.lt.s32.totalorder %v1357, %v1358
        %v1918 = vsel %vm1917, %v1357, %v1358
        %vm1919 = vcmp.lt.s32.totalorder %v1918, %v1359
        %v1920 = vsel %vm1919, %v1918, %v1359
        %vm1921 = vcmp.lt.s32.totalorder %v1920, %v1360
        %v1922 = vsel %vm1921, %v1920, %v1360
        %v1923 = vand.u32 %v1922, 65535
        %v1924 = vshra.s32 %v1922, 16
        %v1925 = vcvt.s32.f32 %v1923
        %v1926 = vcvt.s32.f32 %v1924
        %1927 = vmin.xlane.f32.xlu0 %v1926
        %v1928 = vpop.xlane.xlu0 %1927
        %vm1929 = vcmp.eq.f32.partialorder %v1926, %v1928
        %v1930 = vsel %vm1929, %v1925, inf
        %1931 = vmin.xlane.f32.xlu0 %v1930
        %v1932 = vpop.xlane.xlu0 %1931
        %v1933 = vcvt.f32.s32 %v1932
        %v1934 = vcvt.f32.s32 %v1928
        %v1935 = vshll.u32 %v1934, 16
        %v1936 = vadd.s32 %v1935, %v1933
        %vm1937 = vcmp.lt.s32.totalorder %v1361, %v1362
        %v1938 = vsel %vm1937, %v1361, %v1362
        %vm1939 = vcmp.lt.s32.totalorder %v1938, %v1363
        %v1940 = vsel %vm1939, %v1938, %v1363
        %vm1941 = vcmp.lt.s32.totalorder %v1940, %v1364
        %v1942 = vsel %vm1941, %v1940, %v1364
        %v1943 = vand.u32 %v1942, 65535
        %v1944 = vshra.s32 %v1942, 16
        %v1945 = vcvt.s32.f32 %v1943
        %v1946 = vcvt.s32.f32 %v1944
        %1947 = vmin.xlane.f32.xlu0 %v1946
        %v1948 = vpop.xlane.xlu0 %1947
        %vm1949 = vcmp.eq.f32.partialorder %v1946, %v1948
        %v1950 = vsel %vm1949, %v1945, inf
        %1951 = vmin.xlane.f32.xlu0 %v1950
        %v1952 = vpop.xlane.xlu0 %1951
        %v1953 = vcvt.f32.s32 %v1952
        %v1954 = vcvt.f32.s32 %v1948
        %v1955 = vshll.u32 %v1954, 16
        %v1956 = vadd.s32 %v1955, %v1953
        %vm1957 = vcmp.lt.s32.totalorder %v1365, %v1366
        %v1958 = vsel %vm1957, %v1365, %v1366
        %vm1959 = vcmp.lt.s32.totalorder %v1958, %v1367
        %v1960 = vsel %vm1959, %v1958, %v1367
        %vm1961 = vcmp.lt.s32.totalorder %v1960, %v1368
        %v1962 = vsel %vm1961, %v1960, %v1368
        %v1963 = vand.u32 %v1962, 65535
        %v1964 = vshra.s32 %v1962, 16
        %v1965 = vcvt.s32.f32 %v1963
        %v1966 = vcvt.s32.f32 %v1964
        %1967 = vmin.xlane.f32.xlu0 %v1966
        %v1968 = vpop.xlane.xlu0 %1967
        %vm1969 = vcmp.eq.f32.partialorder %v1966, %v1968
        %v1970 = vsel %vm1969, %v1965, inf
        %1971 = vmin.xlane.f32.xlu0 %v1970
        %v1972 = vpop.xlane.xlu0 %1971
        %v1973 = vcvt.f32.s32 %v1972
        %v1974 = vcvt.f32.s32 %v1968
        %v1975 = vshll.u32 %v1974, 16
        %v1976 = vadd.s32 %v1975, %v1973
        %vm1977 = vcmp.lt.s32.totalorder %v1369, %v1370
        %v1978 = vsel %vm1977, %v1369, %v1370
        %vm1979 = vcmp.lt.s32.totalorder %v1978, %v1371
        %v1980 = vsel %vm1979, %v1978, %v1371
        %vm1981 = vcmp.lt.s32.totalorder %v1980, %v1372
        %v1982 = vsel %vm1981, %v1980, %v1372
        %v1983 = vand.u32 %v1982, 65535
        %v1984 = vshra.s32 %v1982, 16
        %v1985 = vcvt.s32.f32 %v1983
        %v1986 = vcvt.s32.f32 %v1984
        %1987 = vmin.xlane.f32.xlu0 %v1986
        %v1988 = vpop.xlane.xlu0 %1987
        %vm1989 = vcmp.eq.f32.partialorder %v1986, %v1988
        %v1990 = vsel %vm1989, %v1985, inf
        %1991 = vmin.xlane.f32.xlu0 %v1990
        %v1992 = vpop.xlane.xlu0 %1991
        %v1993 = vcvt.f32.s32 %v1992
        %v1994 = vcvt.f32.s32 %v1988
        %v1995 = vshll.u32 %v1994, 16
        %v1996 = vadd.s32 %v1995, %v1993
        %vm1997 = vcmp.lt.s32.totalorder %v1373, %v1374
        %v1998 = vsel %vm1997, %v1373, %v1374
        %vm1999 = vcmp.lt.s32.totalorder %v1998, %v1375
        %v2000 = vsel %vm1999, %v1998, %v1375
        %vm2001 = vcmp.lt.s32.totalorder %v2000, %v1376
        %v2002 = vsel %vm2001, %v2000, %v1376
        %v2003 = vand.u32 %v2002, 65535
        %v2004 = vshra.s32 %v2002, 16
        %v2005 = vcvt.s32.f32 %v2003
        %v2006 = vcvt.s32.f32 %v2004
        %2007 = vmin.xlane.f32.xlu0 %v2006
        %v2008 = vpop.xlane.xlu0 %2007
        %vm2009 = vcmp.eq.f32.partialorder %v2006, %v2008
        %v2010 = vsel %vm2009, %v2005, inf
        %2011 = vmin.xlane.f32.xlu0 %v2010
        %v2012 = vpop.xlane.xlu0 %2011
        %v2013 = vcvt.f32.s32 %v2012
        %v2014 = vcvt.f32.s32 %v2008
        %v2015 = vshll.u32 %v2014, 16
        %v2016 = vadd.s32 %v2015, %v2013
        %vm2017 = vcmp.eq.s32.totalorder %v1117, %v1396
        %vm2018 = vcmp.eq.s32.totalorder %v1118, %v1396
        %vm2019 = vcmp.eq.s32.totalorder %v1119, %v1396
        %vm2020 = vcmp.eq.s32.totalorder %v1120, %v1396
        %vm2021 = vcmp.eq.s32.totalorder %v1117, %v1416
        %vm2022 = vcmp.eq.s32.totalorder %v1118, %v1416
        %vm2023 = vcmp.eq.s32.totalorder %v1119, %v1416
        %vm2024 = vcmp.eq.s32.totalorder %v1120, %v1416
        %vm2025 = vcmp.eq.s32.totalorder %v1117, %v1436
        %vm2026 = vcmp.eq.s32.totalorder %v1118, %v1436
        %vm2027 = vcmp.eq.s32.totalorder %v1119, %v1436
        %vm2028 = vcmp.eq.s32.totalorder %v1120, %v1436
        %vm2029 = vcmp.eq.s32.totalorder %v1117, %v1456
        %vm2030 = vcmp.eq.s32.totalorder %v1118, %v1456
        %vm2031 = vcmp.eq.s32.totalorder %v1119, %v1456
        %vm2032 = vcmp.eq.s32.totalorder %v1120, %v1456
        %vm2033 = vcmp.eq.s32.totalorder %v1117, %v1476
        %vm2034 = vcmp.eq.s32.totalorder %v1118, %v1476
        %vm2035 = vcmp.eq.s32.totalorder %v1119, %v1476
        %vm2036 = vcmp.eq.s32.totalorder %v1120, %v1476
        %vm2037 = vcmp.eq.s32.totalorder %v1117, %v1496
        %vm2038 = vcmp.eq.s32.totalorder %v1118, %v1496
        %vm2039 = vcmp.eq.s32.totalorder %v1119, %v1496
        %vm2040 = vcmp.eq.s32.totalorder %v1120, %v1496
        %vm2041 = vcmp.eq.s32.totalorder %v1117, %v1516
        %vm2042 = vcmp.eq.s32.totalorder %v1118, %v1516
        %vm2043 = vcmp.eq.s32.totalorder %v1119, %v1516
        %vm2044 = vcmp.eq.s32.totalorder %v1120, %v1516
        %vm2045 = vcmp.eq.s32.totalorder %v1117, %v1536
        %vm2046 = vcmp.eq.s32.totalorder %v1118, %v1536
        %vm2047 = vcmp.eq.s32.totalorder %v1119, %v1536
        %vm2048 = vcmp.eq.s32.totalorder %v1120, %v1536
        %vm2049 = vcmp.eq.s32.totalorder %v1117, %v1556
        %vm2050 = vcmp.eq.s32.totalorder %v1118, %v1556
        %vm2051 = vcmp.eq.s32.totalorder %v1119, %v1556
        %vm2052 = vcmp.eq.s32.totalorder %v1120, %v1556
        %vm2053 = vcmp.eq.s32.totalorder %v1117, %v1576
        %vm2054 = vcmp.eq.s32.totalorder %v1118, %v1576
        %vm2055 = vcmp.eq.s32.totalorder %v1119, %v1576
        %vm2056 = vcmp.eq.s32.totalorder %v1120, %v1576
        %vm2057 = vcmp.eq.s32.totalorder %v1117, %v1596
        %vm2058 = vcmp.eq.s32.totalorder %v1118, %v1596
        %vm2059 = vcmp.eq.s32.totalorder %v1119, %v1596
        %vm2060 = vcmp.eq.s32.totalorder %v1120, %v1596
        %vm2061 = vcmp.eq.s32.totalorder %v1117, %v1616
        %vm2062 = vcmp.eq.s32.totalorder %v1118, %v1616
        %vm2063 = vcmp.eq.s32.totalorder %v1119, %v1616
        %vm2064 = vcmp.eq.s32.totalorder %v1120, %v1616
        %vm2065 = vcmp.eq.s32.totalorder %v1117, %v1636
        %vm2066 = vcmp.eq.s32.totalorder %v1118, %v1636
        %vm2067 = vcmp.eq.s32.totalorder %v1119, %v1636
        %vm2068 = vcmp.eq.s32.totalorder %v1120, %v1636
        %vm2069 = vcmp.eq.s32.totalorder %v1117, %v1656
        %vm2070 = vcmp.eq.s32.totalorder %v1118, %v1656
        %vm2071 = vcmp.eq.s32.totalorder %v1119, %v1656
        %vm2072 = vcmp.eq.s32.totalorder %v1120, %v1656
        %vm2073 = vcmp.eq.s32.totalorder %v1117, %v1676
        %vm2074 = vcmp.eq.s32.totalorder %v1118, %v1676
        %vm2075 = vcmp.eq.s32.totalorder %v1119, %v1676
        %vm2076 = vcmp.eq.s32.totalorder %v1120, %v1676
        %vm2077 = vcmp.eq.s32.totalorder %v1117, %v1696
        %vm2078 = vcmp.eq.s32.totalorder %v1118, %v1696
        %vm2079 = vcmp.eq.s32.totalorder %v1119, %v1696
        %vm2080 = vcmp.eq.s32.totalorder %v1120, %v1696
        %vm2081 = vcmp.eq.s32.totalorder %v1117, %v1716
        %vm2082 = vcmp.eq.s32.totalorder %v1118, %v1716
        %vm2083 = vcmp.eq.s32.totalorder %v1119, %v1716
        %vm2084 = vcmp.eq.s32.totalorder %v1120, %v1716
        %vm2085 = vcmp.eq.s32.totalorder %v1117, %v1736
        %vm2086 = vcmp.eq.s32.totalorder %v1118, %v1736
        %vm2087 = vcmp.eq.s32.totalorder %v1119, %v1736
        %vm2088 = vcmp.eq.s32.totalorder %v1120, %v1736
        %vm2089 = vcmp.eq.s32.totalorder %v1117, %v1756
        %vm2090 = vcmp.eq.s32.totalorder %v1118, %v1756
        %vm2091 = vcmp.eq.s32.totalorder %v1119, %v1756
        %vm2092 = vcmp.eq.s32.totalorder %v1120, %v1756
        %vm2093 = vcmp.eq.s32.totalorder %v1117, %v1776
        %vm2094 = vcmp.eq.s32.totalorder %v1118, %v1776
        %vm2095 = vcmp.eq.s32.totalorder %v1119, %v1776
        %vm2096 = vcmp.eq.s32.totalorder %v1120, %v1776
        %vm2097 = vcmp.eq.s32.totalorder %v1117, %v1796
        %vm2098 = vcmp.eq.s32.totalorder %v1118, %v1796
        %vm2099 = vcmp.eq.s32.totalorder %v1119, %v1796
        %vm2100 = vcmp.eq.s32.totalorder %v1120, %v1796
        %vm2101 = vcmp.eq.s32.totalorder %v1117, %v1816
        %vm2102 = vcmp.eq.s32.totalorder %v1118, %v1816
        %vm2103 = vcmp.eq.s32.totalorder %v1119, %v1816
        %vm2104 = vcmp.eq.s32.totalorder %v1120, %v1816
        %vm2105 = vcmp.eq.s32.totalorder %v1117, %v1836
        %vm2106 = vcmp.eq.s32.totalorder %v1118, %v1836
        %vm2107 = vcmp.eq.s32.totalorder %v1119, %v1836
        %vm2108 = vcmp.eq.s32.totalorder %v1120, %v1836
        %vm2109 = vcmp.eq.s32.totalorder %v1117, %v1856
        %vm2110 = vcmp.eq.s32.totalorder %v1118, %v1856
        %vm2111 = vcmp.eq.s32.totalorder %v1119, %v1856
        %vm2112 = vcmp.eq.s32.totalorder %v1120, %v1856
        %vm2113 = vcmp.eq.s32.totalorder %v1117, %v1876
        %vm2114 = vcmp.eq.s32.totalorder %v1118, %v1876
        %vm2115 = vcmp.eq.s32.totalorder %v1119, %v1876
        %vm2116 = vcmp.eq.s32.totalorder %v1120, %v1876
        %vm2117 = vcmp.eq.s32.totalorder %v1117, %v1896
        %vm2118 = vcmp.eq.s32.totalorder %v1118, %v1896
        %vm2119 = vcmp.eq.s32.totalorder %v1119, %v1896
        %vm2120 = vcmp.eq.s32.totalorder %v1120, %v1896
        %vm2121 = vcmp.eq.s32.totalorder %v1117, %v1916
        %vm2122 = vcmp.eq.s32.totalorder %v1118, %v1916
        %vm2123 = vcmp.eq.s32.totalorder %v1119, %v1916
        %vm2124 = vcmp.eq.s32.totalorder %v1120, %v1916
        %vm2125 = vcmp.eq.s32.totalorder %v1117, %v1936
        %vm2126 = vcmp.eq.s32.totalorder %v1118, %v1936
        %vm2127 = vcmp.eq.s32.totalorder %v1119, %v1936
        %vm2128 = vcmp.eq.s32.totalorder %v1120, %v1936
        %vm2129 = vcmp.eq.s32.totalorder %v1117, %v1956
        %vm2130 = vcmp.eq.s32.totalorder %v1118, %v1956
        %vm2131 = vcmp.eq.s32.totalorder %v1119, %v1956
        %vm2132 = vcmp.eq.s32.totalorder %v1120, %v1956
        %vm2133 = vcmp.eq.s32.totalorder %v1117, %v1976
        %vm2134 = vcmp.eq.s32.totalorder %v1118, %v1976
        %vm2135 = vcmp.eq.s32.totalorder %v1119, %v1976
        %vm2136 = vcmp.eq.s32.totalorder %v1120, %v1976
        %vm2137 = vcmp.eq.s32.totalorder %v1117, %v1996
        %vm2138 = vcmp.eq.s32.totalorder %v1118, %v1996
        %vm2139 = vcmp.eq.s32.totalorder %v1119, %v1996
        %vm2140 = vcmp.eq.s32.totalorder %v1120, %v1996
        %vm2141 = vcmp.eq.s32.totalorder %v1117, %v2016
        %vm2142 = vcmp.eq.s32.totalorder %v1118, %v2016
        %vm2143 = vcmp.eq.s32.totalorder %v1119, %v2016
        %vm2144 = vcmp.eq.s32.totalorder %v1120, %v2016
        %v2145 = vsel %vm2017, 1, 0
        %v2146 = vsel %vm2018, 1, 0
        %v2147 = vsel %vm2019, 1, 0
        %v2148 = vsel %vm2020, 1, 0
        %v2149 = vsel %vm2021, 1, 0
        %v2150 = vsel %vm2022, 1, 0
        %v2151 = vsel %vm2023, 1, 0
        %v2152 = vsel %vm2024, 1, 0
        %v2153 = vsel %vm2025, 1, 0
        %v2154 = vsel %vm2026, 1, 0
        %v2155 = vsel %vm2027, 1, 0
        %v2156 = vsel %vm2028, 1, 0
        %v2157 = vsel %vm2029, 1, 0
        %v2158 = vsel %vm2030, 1, 0
        %v2159 = vsel %vm2031, 1, 0
        %v2160 = vsel %vm2032, 1, 0
        %v2161 = vsel %vm2033, 1, 0
        %v2162 = vsel %vm2034, 1, 0
        %v2163 = vsel %vm2035, 1, 0
        %v2164 = vsel %vm2036, 1, 0
        %v2165 = vsel %vm2037, 1, 0
        %v2166 = vsel %vm2038, 1, 0
        %v2167 = vsel %vm2039, 1, 0
        %v2168 = vsel %vm2040, 1, 0
        %v2169 = vsel %vm2041, 1, 0
        %v2170 = vsel %vm2042, 1, 0
        %v2171 = vsel %vm2043, 1, 0
        %v2172 = vsel %vm2044, 1, 0
        %v2173 = vsel %vm2045, 1, 0
        %v2174 = vsel %vm2046, 1, 0
        %v2175 = vsel %vm2047, 1, 0
        %v2176 = vsel %vm2048, 1, 0
        %v2177 = vsel %vm2049, 1, 0
        %v2178 = vsel %vm2050, 1, 0
        %v2179 = vsel %vm2051, 1, 0
        %v2180 = vsel %vm2052, 1, 0
        %v2181 = vsel %vm2053, 1, 0
        %v2182 = vsel %vm2054, 1, 0
        %v2183 = vsel %vm2055, 1, 0
        %v2184 = vsel %vm2056, 1, 0
        %v2185 = vsel %vm2057, 1, 0
        %v2186 = vsel %vm2058, 1, 0
        %v2187 = vsel %vm2059, 1, 0
        %v2188 = vsel %vm2060, 1, 0
        %v2189 = vsel %vm2061, 1, 0
        %v2190 = vsel %vm2062, 1, 0
        %v2191 = vsel %vm2063, 1, 0
        %v2192 = vsel %vm2064, 1, 0
        %v2193 = vsel %vm2065, 1, 0
        %v2194 = vsel %vm2066, 1, 0
        %v2195 = vsel %vm2067, 1, 0
        %v2196 = vsel %vm2068, 1, 0
        %v2197 = vsel %vm2069, 1, 0
        %v2198 = vsel %vm2070, 1, 0
        %v2199 = vsel %vm2071, 1, 0
        %v2200 = vsel %vm2072, 1, 0
        %v2201 = vsel %vm2073, 1, 0
        %v2202 = vsel %vm2074, 1, 0
        %v2203 = vsel %vm2075, 1, 0
        %v2204 = vsel %vm2076, 1, 0
        %v2205 = vsel %vm2077, 1, 0
        %v2206 = vsel %vm2078, 1, 0
        %v2207 = vsel %vm2079, 1, 0
        %v2208 = vsel %vm2080, 1, 0
        %v2209 = vsel %vm2081, 1, 0
        %v2210 = vsel %vm2082, 1, 0
        %v2211 = vsel %vm2083, 1, 0
        %v2212 = vsel %vm2084, 1, 0
        %v2213 = vsel %vm2085, 1, 0
        %v2214 = vsel %vm2086, 1, 0
        %v2215 = vsel %vm2087, 1, 0
        %v2216 = vsel %vm2088, 1, 0
        %v2217 = vsel %vm2089, 1, 0
        %v2218 = vsel %vm2090, 1, 0
        %v2219 = vsel %vm2091, 1, 0
        %v2220 = vsel %vm2092, 1, 0
        %v2221 = vsel %vm2093, 1, 0
        %v2222 = vsel %vm2094, 1, 0
        %v2223 = vsel %vm2095, 1, 0
        %v2224 = vsel %vm2096, 1, 0
        %v2225 = vsel %vm2097, 1, 0
        %v2226 = vsel %vm2098, 1, 0
        %v2227 = vsel %vm2099, 1, 0
        %v2228 = vsel %vm2100, 1, 0
        %v2229 = vsel %vm2101, 1, 0
        %v2230 = vsel %vm2102, 1, 0
        %v2231 = vsel %vm2103, 1, 0
        %v2232 = vsel %vm2104, 1, 0
        %v2233 = vsel %vm2105, 1, 0
        %v2234 = vsel %vm2106, 1, 0
        %v2235 = vsel %vm2107, 1, 0
        %v2236 = vsel %vm2108, 1, 0
        %v2237 = vsel %vm2109, 1, 0
        %v2238 = vsel %vm2110, 1, 0
        %v2239 = vsel %vm2111, 1, 0
        %v2240 = vsel %vm2112, 1, 0
        %v2241 = vsel %vm2113, 1, 0
        %v2242 = vsel %vm2114, 1, 0
        %v2243 = vsel %vm2115, 1, 0
        %v2244 = vsel %vm2116, 1, 0
        %v2245 = vsel %vm2117, 1, 0
        %v2246 = vsel %vm2118, 1, 0
        %v2247 = vsel %vm2119, 1, 0
        %v2248 = vsel %vm2120, 1, 0
        %v2249 = vsel %vm2121, 1, 0
        %v2250 = vsel %vm2122, 1, 0
        %v2251 = vsel %vm2123, 1, 0
        %v2252 = vsel %vm2124, 1, 0
        %v2253 = vsel %vm2125, 1, 0
        %v2254 = vsel %vm2126, 1, 0
        %v2255 = vsel %vm2127, 1, 0
        %v2256 = vsel %vm2128, 1, 0
        %v2257 = vsel %vm2129, 1, 0
        %v2258 = vsel %vm2130, 1, 0
        %v2259 = vsel %vm2131, 1, 0
        %v2260 = vsel %vm2132, 1, 0
        %v2261 = vsel %vm2133, 1, 0
        %v2262 = vsel %vm2134, 1, 0
        %v2263 = vsel %vm2135, 1, 0
        %v2264 = vsel %vm2136, 1, 0
        %v2265 = vsel %vm2137, 1, 0
        %v2266 = vsel %vm2138, 1, 0
        %v2267 = vsel %vm2139, 1, 0
        %v2268 = vsel %vm2140, 1, 0
        %v2269 = vsel %vm2141, 1, 0
        %v2270 = vsel %vm2142, 1, 0
        %v2271 = vsel %vm2143, 1, 0
        %v2272 = vsel %vm2144, 1, 0
        %v2273 = vcvt.s32.f32 %v2145
        %v2274 = vcvt.s32.f32 %v2146
        %v2275 = vcvt.s32.f32 %v2147
        %v2276 = vcvt.s32.f32 %v2148
        %v2277 = vcvt.s32.f32 %v2149
        %v2278 = vcvt.s32.f32 %v2150
        %v2279 = vcvt.s32.f32 %v2151
        %v2280 = vcvt.s32.f32 %v2152
        %v2281 = vcvt.s32.f32 %v2153
        %v2282 = vcvt.s32.f32 %v2154
        %v2283 = vcvt.s32.f32 %v2155
        %v2284 = vcvt.s32.f32 %v2156
        %v2285 = vcvt.s32.f32 %v2157
        %v2286 = vcvt.s32.f32 %v2158
        %v2287 = vcvt.s32.f32 %v2159
        %v2288 = vcvt.s32.f32 %v2160
        %v2289 = vcvt.s32.f32 %v2161
        %v2290 = vcvt.s32.f32 %v2162
        %v2291 = vcvt.s32.f32 %v2163
        %v2292 = vcvt.s32.f32 %v2164
        %v2293 = vcvt.s32.f32 %v2165
        %v2294 = vcvt.s32.f32 %v2166
        %v2295 = vcvt.s32.f32 %v2167
        %v2296 = vcvt.s32.f32 %v2168
        %v2297 = vcvt.s32.f32 %v2169
        %v2298 = vcvt.s32.f32 %v2170
        %v2299 = vcvt.s32.f32 %v2171
        %v2300 = vcvt.s32.f32 %v2172
        %v2301 = vcvt.s32.f32 %v2173
        %v2302 = vcvt.s32.f32 %v2174
        %v2303 = vcvt.s32.f32 %v2175
        %v2304 = vcvt.s32.f32 %v2176
        %v2305 = vcvt.s32.f32 %v2177
        %v2306 = vcvt.s32.f32 %v2178
        %v2307 = vcvt.s32.f32 %v2179
        %v2308 = vcvt.s32.f32 %v2180
        %v2309 = vcvt.s32.f32 %v2181
        %v2310 = vcvt.s32.f32 %v2182
        %v2311 = vcvt.s32.f32 %v2183
        %v2312 = vcvt.s32.f32 %v2184
        %v2313 = vcvt.s32.f32 %v2185
        %v2314 = vcvt.s32.f32 %v2186
        %v2315 = vcvt.s32.f32 %v2187
        %v2316 = vcvt.s32.f32 %v2188
        %v2317 = vcvt.s32.f32 %v2189
        %v2318 = vcvt.s32.f32 %v2190
        %v2319 = vcvt.s32.f32 %v2191
        %v2320 = vcvt.s32.f32 %v2192
        %v2321 = vcvt.s32.f32 %v2193
        %v2322 = vcvt.s32.f32 %v2194
        %v2323 = vcvt.s32.f32 %v2195
        %v2324 = vcvt.s32.f32 %v2196
        %v2325 = vcvt.s32.f32 %v2197
        %v2326 = vcvt.s32.f32 %v2198
        %v2327 = vcvt.s32.f32 %v2199
        %v2328 = vcvt.s32.f32 %v2200
        %v2329 = vcvt.s32.f32 %v2201
        %v2330 = vcvt.s32.f32 %v2202
        %v2331 = vcvt.s32.f32 %v2203
        %v2332 = vcvt.s32.f32 %v2204
        %v2333 = vcvt.s32.f32 %v2205
        %v2334 = vcvt.s32.f32 %v2206
        %v2335 = vcvt.s32.f32 %v2207
        %v2336 = vcvt.s32.f32 %v2208
        %v2337 = vcvt.s32.f32 %v2209
        %v2338 = vcvt.s32.f32 %v2210
        %v2339 = vcvt.s32.f32 %v2211
        %v2340 = vcvt.s32.f32 %v2212
        %v2341 = vcvt.s32.f32 %v2213
        %v2342 = vcvt.s32.f32 %v2214
        %v2343 = vcvt.s32.f32 %v2215
        %v2344 = vcvt.s32.f32 %v2216
        %v2345 = vcvt.s32.f32 %v2217
        %v2346 = vcvt.s32.f32 %v2218
        %v2347 = vcvt.s32.f32 %v2219
        %v2348 = vcvt.s32.f32 %v2220
        %v2349 = vcvt.s32.f32 %v2221
        %v2350 = vcvt.s32.f32 %v2222
        %v2351 = vcvt.s32.f32 %v2223
        %v2352 = vcvt.s32.f32 %v2224
        %v2353 = vcvt.s32.f32 %v2225
        %v2354 = vcvt.s32.f32 %v2226
        %v2355 = vcvt.s32.f32 %v2227
        %v2356 = vcvt.s32.f32 %v2228
        %v2357 = vcvt.s32.f32 %v2229
        %v2358 = vcvt.s32.f32 %v2230
        %v2359 = vcvt.s32.f32 %v2231
        %v2360 = vcvt.s32.f32 %v2232
        %v2361 = vcvt.s32.f32 %v2233
        %v2362 = vcvt.s32.f32 %v2234
        %v2363 = vcvt.s32.f32 %v2235
        %v2364 = vcvt.s32.f32 %v2236
        %v2365 = vcvt.s32.f32 %v2237
        %v2366 = vcvt.s32.f32 %v2238
        %v2367 = vcvt.s32.f32 %v2239
        %v2368 = vcvt.s32.f32 %v2240
        %v2369 = vcvt.s32.f32 %v2241
        %v2370 = vcvt.s32.f32 %v2242
        %v2371 = vcvt.s32.f32 %v2243
        %v2372 = vcvt.s32.f32 %v2244
        %v2373 = vcvt.s32.f32 %v2245
        %v2374 = vcvt.s32.f32 %v2246
        %v2375 = vcvt.s32.f32 %v2247
        %v2376 = vcvt.s32.f32 %v2248
        %v2377 = vcvt.s32.f32 %v2249
        %v2378 = vcvt.s32.f32 %v2250
        %v2379 = vcvt.s32.f32 %v2251
        %v2380 = vcvt.s32.f32 %v2252
        %v2381 = vcvt.s32.f32 %v2253
        %v2382 = vcvt.s32.f32 %v2254
        %v2383 = vcvt.s32.f32 %v2255
        %v2384 = vcvt.s32.f32 %v2256
        %v2385 = vcvt.s32.f32 %v2257
        %v2386 = vcvt.s32.f32 %v2258
        %v2387 = vcvt.s32.f32 %v2259
        %v2388 = vcvt.s32.f32 %v2260
        %v2389 = vcvt.s32.f32 %v2261
        %v2390 = vcvt.s32.f32 %v2262
        %v2391 = vcvt.s32.f32 %v2263
        %v2392 = vcvt.s32.f32 %v2264
        %v2393 = vcvt.s32.f32 %v2265
        %v2394 = vcvt.s32.f32 %v2266
        %v2395 = vcvt.s32.f32 %v2267
        %v2396 = vcvt.s32.f32 %v2268
        %v2397 = vcvt.s32.f32 %v2269
        %v2398 = vcvt.s32.f32 %v2270
        %v2399 = vcvt.s32.f32 %v2271
        %v2400 = vcvt.s32.f32 %v2272
        %v2401 = vld [vmem:[#allocation8] sm:$0xff]
        %v2402 = vld [vmem:[#allocation8 + $0x8] sm:$0xff]
        %v2403 = vld [vmem:[#allocation8 + $0x10] sm:$0xff]
        %v2404 = vld [vmem:[#allocation8 + $0x18] sm:$0xff]
        %v2405 = vld [vmem:[#allocation8 + $0x20] sm:$0xff]
        %v2406 = vld [vmem:[#allocation8 + $0x28] sm:$0xff]
        %v2407 = vld [vmem:[#allocation8 + $0x30] sm:$0xff]
        %v2408 = vld [vmem:[#allocation8 + $0x38] sm:$0xff]
        %v2409 = vld [vmem:[#allocation8 + $0x40] sm:$0xff]
        %v2410 = vld [vmem:[#allocation8 + $0x48] sm:$0xff]
        %v2411 = vld [vmem:[#allocation8 + $0x50] sm:$0xff]
        %v2412 = vld [vmem:[#allocation8 + $0x58] sm:$0xff]
        %v2413 = vld [vmem:[#allocation8 + $0x60] sm:$0xff]
        %v2414 = vld [vmem:[#allocation8 + $0x68] sm:$0xff]
        %v2415 = vld [vmem:[#allocation8 + $0x70] sm:$0xff]
        %v2416 = vld [vmem:[#allocation8 + $0x78] sm:$0xff]
        %v2417 = vld [vmem:[#allocation8 + $0x80] sm:$0xff]
        %v2418 = vld [vmem:[#allocation8 + $0x88] sm:$0xff]
        %v2419 = vld [vmem:[#allocation8 + $0x90] sm:$0xff]
        %v2420 = vld [vmem:[#allocation8 + $0x98] sm:$0xff]
        %v2421 = vld [vmem:[#allocation8 + $0xa0] sm:$0xff]
        %v2422 = vld [vmem:[#allocation8 + $0xa8] sm:$0xff]
        %v2423 = vld [vmem:[#allocation8 + $0xb0] sm:$0xff]
        %v2424 = vld [vmem:[#allocation8 + $0xb8] sm:$0xff]
        %v2425 = vld [vmem:[#allocation8 + $0xc0] sm:$0xff]
        %v2426 = vld [vmem:[#allocation8 + $0xc8] sm:$0xff]
        %v2427 = vld [vmem:[#allocation8 + $0xd0] sm:$0xff]
        %v2428 = vld [vmem:[#allocation8 + $0xd8] sm:$0xff]
        %v2429 = vld [vmem:[#allocation8 + $0xe0] sm:$0xff]
        %v2430 = vld [vmem:[#allocation8 + $0xe8] sm:$0xff]
        %v2431 = vld [vmem:[#allocation8 + $0xf0] sm:$0xff]
        %v2432 = vld [vmem:[#allocation8 + $0xf8] sm:$0xff]
        %v2433 = vld [vmem:[#allocation8 + $0x100] sm:$0xff]
        %v2434 = vld [vmem:[#allocation8 + $0x108] sm:$0xff]
        %v2435 = vld [vmem:[#allocation8 + $0x110] sm:$0xff]
        %v2436 = vld [vmem:[#allocation8 + $0x118] sm:$0xff]
        %v2437 = vld [vmem:[#allocation8 + $0x120] sm:$0xff]
        %v2438 = vld [vmem:[#allocation8 + $0x128] sm:$0xff]
        %v2439 = vld [vmem:[#allocation8 + $0x130] sm:$0xff]
        %v2440 = vld [vmem:[#allocation8 + $0x138] sm:$0xff]
        %v2441 = vld [vmem:[#allocation8 + $0x140] sm:$0xff]
        %v2442 = vld [vmem:[#allocation8 + $0x148] sm:$0xff]
        %v2443 = vld [vmem:[#allocation8 + $0x150] sm:$0xff]
        %v2444 = vld [vmem:[#allocation8 + $0x158] sm:$0xff]
        %v2445 = vld [vmem:[#allocation8 + $0x160] sm:$0xff]
        %v2446 = vld [vmem:[#allocation8 + $0x168] sm:$0xff]
        %v2447 = vld [vmem:[#allocation8 + $0x170] sm:$0xff]
        %v2448 = vld [vmem:[#allocation8 + $0x178] sm:$0xff]
        %v2449 = vld [vmem:[#allocation8 + $0x180] sm:$0xff]
        %v2450 = vld [vmem:[#allocation8 + $0x188] sm:$0xff]
        %v2451 = vld [vmem:[#allocation8 + $0x190] sm:$0xff]
        %v2452 = vld [vmem:[#allocation8 + $0x198] sm:$0xff]
        %v2453 = vld [vmem:[#allocation8 + $0x1a0] sm:$0xff]
        %v2454 = vld [vmem:[#allocation8 + $0x1a8] sm:$0xff]
        %v2455 = vld [vmem:[#allocation8 + $0x1b0] sm:$0xff]
        %v2456 = vld [vmem:[#allocation8 + $0x1b8] sm:$0xff]
        %v2457 = vld [vmem:[#allocation8 + $0x1c0] sm:$0xff]
        %v2458 = vld [vmem:[#allocation8 + $0x1c8] sm:$0xff]
        %v2459 = vld [vmem:[#allocation8 + $0x1d0] sm:$0xff]
        %v2460 = vld [vmem:[#allocation8 + $0x1d8] sm:$0xff]
        %v2461 = vld [vmem:[#allocation8 + $0x1e0] sm:$0xff]
        %v2462 = vld [vmem:[#allocation8 + $0x1e8] sm:$0xff]
        %v2463 = vld [vmem:[#allocation8 + $0x1f0] sm:$0xff]
        %v2464 = vld [vmem:[#allocation8 + $0x1f8] sm:$0xff]
        %2465 = vmatpush.msra.mxu0 %v2416
        %2466 = vmatpush.msra.mxu0 %v2415
        %2467 = vmatpush.msra.mxu0 %v2414
        %2468 = vmatpush.msra.mxu0 %v2413
        %2469 = vmatpush.msra.mxu0 %v2412
        %2470 = vmatpush.msra.mxu0 %v2411
        %2471 = vmatpush.msra.mxu0 %v2410
        %2472 = vmatpush.msra.mxu0 %v2409
        %2473 = vmatpush.msra.mxu0 %v2408
        %2474 = vmatpush.msra.mxu0 %v2407
        %2475 = vmatpush.msra.mxu0 %v2406
        %2476 = vmatpush.msra.mxu0 %v2405
        %2477 = vmatpush.msra.mxu0 %v2404
        %2478 = vmatpush.msra.mxu0 %v2403
        %2479 = vmatpush.msra.mxu0 %v2402
        %2480 = vmatpush.msra.mxu0 %v2401
        %2481 = vmatmul.f32.gmra.mxu0 %v2273
        %v2482 = vpop.f32.mrf.mxu0
        %v2483 = vadd.f32 0.0, %v2482
        %2484 = vmatmul.f32.gmra.mxu0 %v2277
        %v2485 = vpop.f32.mrf.mxu0
        %v2486 = vadd.f32 0.0, %v2485
        %2487 = vmatmul.f32.gmra.mxu0 %v2281
        %v2488 = vpop.f32.mrf.mxu0
        %v2489 = vadd.f32 0.0, %v2488
        %2490 = vmatmul.f32.gmra.mxu0 %v2285
        %v2491 = vpop.f32.mrf.mxu0
        %v2492 = vadd.f32 0.0, %v2491
        %2493 = vmatmul.f32.gmra.mxu0 %v2289
        %v2494 = vpop.f32.mrf.mxu0
        %v2495 = vadd.f32 0.0, %v2494
        %2496 = vmatmul.f32.gmra.mxu0 %v2293
        %v2497 = vpop.f32.mrf.mxu0
        %v2498 = vadd.f32 0.0, %v2497
        %2499 = vmatmul.f32.gmra.mxu0 %v2297
        %v2500 = vpop.f32.mrf.mxu0
        %v2501 = vadd.f32 0.0, %v2500
        %2502 = vmatmul.f32.gmra.mxu0 %v2301
        %v2503 = vpop.f32.mrf.mxu0
        %v2504 = vadd.f32 0.0, %v2503
        %2505 = vmatmul.f32.gmra.mxu0 %v2305
        %v2506 = vpop.f32.mrf.mxu0
        %v2507 = vadd.f32 0.0, %v2506
        %2508 = vmatmul.f32.gmra.mxu0 %v2309
        %v2509 = vpop.f32.mrf.mxu0
        %v2510 = vadd.f32 0.0, %v2509
        %2511 = vmatmul.f32.gmra.mxu0 %v2313
        %v2512 = vpop.f32.mrf.mxu0
        %v2513 = vadd.f32 0.0, %v2512
        %2514 = vmatmul.f32.gmra.mxu0 %v2317
        %v2515 = vpop.f32.mrf.mxu0
        %v2516 = vadd.f32 0.0, %v2515
        %2517 = vmatmul.f32.gmra.mxu0 %v2321
        %v2518 = vpop.f32.mrf.mxu0
        %v2519 = vadd.f32 0.0, %v2518
        %2520 = vmatmul.f32.gmra.mxu0 %v2325
        %v2521 = vpop.f32.mrf.mxu0
        %v2522 = vadd.f32 0.0, %v2521
        %2523 = vmatmul.f32.gmra.mxu0 %v2329
        %v2524 = vpop.f32.mrf.mxu0
        %v2525 = vadd.f32 0.0, %v2524
        %2526 = vmatmul.f32.gmra.mxu0 %v2333
        %v2527 = vpop.f32.mrf.mxu0
        %v2528 = vadd.f32 0.0, %v2527
        %2529 = vmatmul.f32.gmra.mxu0 %v2337
        %v2530 = vpop.f32.mrf.mxu0
        %v2531 = vadd.f32 0.0, %v2530
        %2532 = vmatmul.f32.gmra.mxu0 %v2341
        %v2533 = vpop.f32.mrf.mxu0
        %v2534 = vadd.f32 0.0, %v2533
        %2535 = vmatmul.f32.gmra.mxu0 %v2345
        %v2536 = vpop.f32.mrf.mxu0
        %v2537 = vadd.f32 0.0, %v2536
        %2538 = vmatmul.f32.gmra.mxu0 %v2349
        %v2539 = vpop.f32.mrf.mxu0
        %v2540 = vadd.f32 0.0, %v2539
        %2541 = vmatmul.f32.gmra.mxu0 %v2353
        %v2542 = vpop.f32.mrf.mxu0
        %v2543 = vadd.f32 0.0, %v2542
        %2544 = vmatmul.f32.gmra.mxu0 %v2357
        %v2545 = vpop.f32.mrf.mxu0
        %v2546 = vadd.f32 0.0, %v2545
        %2547 = vmatmul.f32.gmra.mxu0 %v2361
        %v2548 = vpop.f32.mrf.mxu0
        %v2549 = vadd.f32 0.0, %v2548
        %2550 = vmatmul.f32.gmra.mxu0 %v2365
        %v2551 = vpop.f32.mrf.mxu0
        %v2552 = vadd.f32 0.0, %v2551
        %2553 = vmatmul.f32.gmra.mxu0 %v2369
        %v2554 = vpop.f32.mrf.mxu0
        %v2555 = vadd.f32 0.0, %v2554
        %2556 = vmatmul.f32.gmra.mxu0 %v2373
        %v2557 = vpop.f32.mrf.mxu0
        %v2558 = vadd.f32 0.0, %v2557
        %2559 = vmatmul.f32.gmra.mxu0 %v2377
        %v2560 = vpop.f32.mrf.mxu0
        %v2561 = vadd.f32 0.0, %v2560
        %2562 = vmatmul.f32.gmra.mxu0 %v2381
        %v2563 = vpop.f32.mrf.mxu0
        %v2564 = vadd.f32 0.0, %v2563
        %2565 = vmatmul.f32.gmra.mxu0 %v2385
        %v2566 = vpop.f32.mrf.mxu0
        %v2567 = vadd.f32 0.0, %v2566
        %2568 = vmatmul.f32.gmra.mxu0 %v2389
        %v2569 = vpop.f32.mrf.mxu0
        %v2570 = vadd.f32 0.0, %v2569
        %2571 = vmatmul.f32.gmra.mxu0 %v2393
        %v2572 = vpop.f32.mrf.mxu0
        %v2573 = vadd.f32 0.0, %v2572
        %2574 = vmatmul.f32.gmra.mxu0 %v2397
        %v2575 = vpop.f32.mrf.mxu0
        %v2576 = vadd.f32 0.0, %v2575
        %2577 = vdwg.mxu0
        %2578 = vmatpush.msra.mxu0 %v2432
        %2579 = vmatpush.msra.mxu0 %v2431
        %2580 = vmatpush.msra.mxu0 %v2430
        %2581 = vmatpush.msra.mxu0 %v2429
        %2582 = vmatpush.msra.mxu0 %v2428
        %2583 = vmatpush.msra.mxu0 %v2427
        %2584 = vmatpush.msra.mxu0 %v2426
        %2585 = vmatpush.msra.mxu0 %v2425
        %2586 = vmatpush.msra.mxu0 %v2424
        %2587 = vmatpush.msra.mxu0 %v2423
        %2588 = vmatpush.msra.mxu0 %v2422
        %2589 = vmatpush.msra.mxu0 %v2421
        %2590 = vmatpush.msra.mxu0 %v2420
        %2591 = vmatpush.msra.mxu0 %v2419
        %2592 = vmatpush.msra.mxu0 %v2418
        %2593 = vmatpush.msra.mxu0 %v2417
        %2594 = vmatmul.f32.gmra.mxu0 %v2274
        %v2595 = vpop.f32.mrf.mxu0
        %v2596 = vadd.f32 %v2483, %v2595
        %2597 = vmatmul.f32.gmra.mxu0 %v2278
        %v2598 = vpop.f32.mrf.mxu0
        %v2599 = vadd.f32 %v2486, %v2598
        %2600 = vmatmul.f32.gmra.mxu0 %v2282
        %v2601 = vpop.f32.mrf.mxu0
        %v2602 = vadd.f32 %v2489, %v2601
        %2603 = vmatmul.f32.gmra.mxu0 %v2286
        %v2604 = vpop.f32.mrf.mxu0
        %v2605 = vadd.f32 %v2492, %v2604
        %2606 = vmatmul.f32.gmra.mxu0 %v2290
        %v2607 = vpop.f32.mrf.mxu0
        %v2608 = vadd.f32 %v2495, %v2607
        %2609 = vmatmul.f32.gmra.mxu0 %v2294
        %v2610 = vpop.f32.mrf.mxu0
        %v2611 = vadd.f32 %v2498, %v2610
        %2612 = vmatmul.f32.gmra.mxu0 %v2298
        %v2613 = vpop.f32.mrf.mxu0
        %v2614 = vadd.f32 %v2501, %v2613
        %2615 = vmatmul.f32.gmra.mxu0 %v2302
        %v2616 = vpop.f32.mrf.mxu0
        %v2617 = vadd.f32 %v2504, %v2616
        %2618 = vmatmul.f32.gmra.mxu0 %v2306
        %v2619 = vpop.f32.mrf.mxu0
        %v2620 = vadd.f32 %v2507, %v2619
        %2621 = vmatmul.f32.gmra.mxu0 %v2310
        %v2622 = vpop.f32.mrf.mxu0
        %v2623 = vadd.f32 %v2510, %v2622
        %2624 = vmatmul.f32.gmra.mxu0 %v2314
        %v2625 = vpop.f32.mrf.mxu0
        %v2626 = vadd.f32 %v2513, %v2625
        %2627 = vmatmul.f32.gmra.mxu0 %v2318
        %v2628 = vpop.f32.mrf.mxu0
        %v2629 = vadd.f32 %v2516, %v2628
        %2630 = vmatmul.f32.gmra.mxu0 %v2322
        %v2631 = vpop.f32.mrf.mxu0
        %v2632 = vadd.f32 %v2519, %v2631
        %2633 = vmatmul.f32.gmra.mxu0 %v2326
        %v2634 = vpop.f32.mrf.mxu0
        %v2635 = vadd.f32 %v2522, %v2634
        %2636 = vmatmul.f32.gmra.mxu0 %v2330
        %v2637 = vpop.f32.mrf.mxu0
        %v2638 = vadd.f32 %v2525, %v2637
        %2639 = vmatmul.f32.gmra.mxu0 %v2334
        %v2640 = vpop.f32.mrf.mxu0
        %v2641 = vadd.f32 %v2528, %v2640
        %2642 = vmatmul.f32.gmra.mxu0 %v2338
        %v2643 = vpop.f32.mrf.mxu0
        %v2644 = vadd.f32 %v2531, %v2643
        %2645 = vmatmul.f32.gmra.mxu0 %v2342
        %v2646 = vpop.f32.mrf.mxu0
        %v2647 = vadd.f32 %v2534, %v2646
        %2648 = vmatmul.f32.gmra.mxu0 %v2346
        %v2649 = vpop.f32.mrf.mxu0
        %v2650 = vadd.f32 %v2537, %v2649
        %2651 = vmatmul.f32.gmra.mxu0 %v2350
        %v2652 = vpop.f32.mrf.mxu0
        %v2653 = vadd.f32 %v2540, %v2652
        %2654 = vmatmul.f32.gmra.mxu0 %v2354
        %v2655 = vpop.f32.mrf.mxu0
        %v2656 = vadd.f32 %v2543, %v2655
        %2657 = vmatmul.f32.gmra.mxu0 %v2358
        %v2658 = vpop.f32.mrf.mxu0
        %v2659 = vadd.f32 %v2546, %v2658
        %2660 = vmatmul.f32.gmra.mxu0 %v2362
        %v2661 = vpop.f32.mrf.mxu0
        %v2662 = vadd.f32 %v2549, %v2661
        %2663 = vmatmul.f32.gmra.mxu0 %v2366
        %v2664 = vpop.f32.mrf.mxu0
        %v2665 = vadd.f32 %v2552, %v2664
        %2666 = vmatmul.f32.gmra.mxu0 %v2370
        %v2667 = vpop.f32.mrf.mxu0
        %v2668 = vadd.f32 %v2555, %v2667
        %2669 = vmatmul.f32.gmra.mxu0 %v2374
        %v2670 = vpop.f32.mrf.mxu0
        %v2671 = vadd.f32 %v2558, %v2670
        %2672 = vmatmul.f32.gmra.mxu0 %v2378
        %v2673 = vpop.f32.mrf.mxu0
        %v2674 = vadd.f32 %v2561, %v2673
        %2675 = vmatmul.f32.gmra.mxu0 %v2382
        %v2676 = vpop.f32.mrf.mxu0
        %v2677 = vadd.f32 %v2564, %v2676
        %2678 = vmatmul.f32.gmra.mxu0 %v2386
        %v2679 = vpop.f32.mrf.mxu0
        %v2680 = vadd.f32 %v2567, %v2679
        %2681 = vmatmul.f32.gmra.mxu0 %v2390
        %v2682 = vpop.f32.mrf.mxu0
        %v2683 = vadd.f32 %v2570, %v2682
        %2684 = vmatmul.f32.gmra.mxu0 %v2394
        %v2685 = vpop.f32.mrf.mxu0
        %v2686 = vadd.f32 %v2573, %v2685
        %2687 = vmatmul.f32.gmra.mxu0 %v2398
        %v2688 = vpop.f32.mrf.mxu0
        %v2689 = vadd.f32 %v2576, %v2688
        %2690 = vdwg.mxu0
        %2691 = vmatpush.msra.mxu0 %v2448
        %2692 = vmatpush.msra.mxu0 %v2447
        %2693 = vmatpush.msra.mxu0 %v2446
        %2694 = vmatpush.msra.mxu0 %v2445
        %2695 = vmatpush.msra.mxu0 %v2444
        %2696 = vmatpush.msra.mxu0 %v2443
        %2697 = vmatpush.msra.mxu0 %v2442
        %2698 = vmatpush.msra.mxu0 %v2441
        %2699 = vmatpush.msra.mxu0 %v2440
        %2700 = vmatpush.msra.mxu0 %v2439
        %2701 = vmatpush.msra.mxu0 %v2438
        %2702 = vmatpush.msra.mxu0 %v2437
        %2703 = vmatpush.msra.mxu0 %v2436
        %2704 = vmatpush.msra.mxu0 %v2435
        %2705 = vmatpush.msra.mxu0 %v2434
        %2706 = vmatpush.msra.mxu0 %v2433
        %2707 = vmatmul.f32.gmra.mxu0 %v2275
        %v2708 = vpop.f32.mrf.mxu0
        %v2709 = vadd.f32 %v2596, %v2708
        %2710 = vmatmul.f32.gmra.mxu0 %v2279
        %v2711 = vpop.f32.mrf.mxu0
        %v2712 = vadd.f32 %v2599, %v2711
        %2713 = vmatmul.f32.gmra.mxu0 %v2283
        %v2714 = vpop.f32.mrf.mxu0
        %v2715 = vadd.f32 %v2602, %v2714
        %2716 = vmatmul.f32.gmra.mxu0 %v2287
        %v2717 = vpop.f32.mrf.mxu0
        %v2718 = vadd.f32 %v2605, %v2717
        %2719 = vmatmul.f32.gmra.mxu0 %v2291
        %v2720 = vpop.f32.mrf.mxu0
        %v2721 = vadd.f32 %v2608, %v2720
        %2722 = vmatmul.f32.gmra.mxu0 %v2295
        %v2723 = vpop.f32.mrf.mxu0
        %v2724 = vadd.f32 %v2611, %v2723
        %2725 = vmatmul.f32.gmra.mxu0 %v2299
        %v2726 = vpop.f32.mrf.mxu0
        %v2727 = vadd.f32 %v2614, %v2726
        %2728 = vmatmul.f32.gmra.mxu0 %v2303
        %v2729 = vpop.f32.mrf.mxu0
        %v2730 = vadd.f32 %v2617, %v2729
        %2731 = vmatmul.f32.gmra.mxu0 %v2307
        %v2732 = vpop.f32.mrf.mxu0
        %v2733 = vadd.f32 %v2620, %v2732
        %2734 = vmatmul.f32.gmra.mxu0 %v2311
        %v2735 = vpop.f32.mrf.mxu0
        %v2736 = vadd.f32 %v2623, %v2735
        %2737 = vmatmul.f32.gmra.mxu0 %v2315
        %v2738 = vpop.f32.mrf.mxu0
        %v2739 = vadd.f32 %v2626, %v2738
        %2740 = vmatmul.f32.gmra.mxu0 %v2319
        %v2741 = vpop.f32.mrf.mxu0
        %v2742 = vadd.f32 %v2629, %v2741
        %2743 = vmatmul.f32.gmra.mxu0 %v2323
        %v2744 = vpop.f32.mrf.mxu0
        %v2745 = vadd.f32 %v2632, %v2744
        %2746 = vmatmul.f32.gmra.mxu0 %v2327
        %v2747 = vpop.f32.mrf.mxu0
        %v2748 = vadd.f32 %v2635, %v2747
        %2749 = vmatmul.f32.gmra.mxu0 %v2331
        %v2750 = vpop.f32.mrf.mxu0
        %v2751 = vadd.f32 %v2638, %v2750
        %2752 = vmatmul.f32.gmra.mxu0 %v2335
        %v2753 = vpop.f32.mrf.mxu0
        %v2754 = vadd.f32 %v2641, %v2753
        %2755 = vmatmul.f32.gmra.mxu0 %v2339
        %v2756 = vpop.f32.mrf.mxu0
        %v2757 = vadd.f32 %v2644, %v2756
        %2758 = vmatmul.f32.gmra.mxu0 %v2343
        %v2759 = vpop.f32.mrf.mxu0
        %v2760 = vadd.f32 %v2647, %v2759
        %2761 = vmatmul.f32.gmra.mxu0 %v2347
        %v2762 = vpop.f32.mrf.mxu0
        %v2763 = vadd.f32 %v2650, %v2762
        %2764 = vmatmul.f32.gmra.mxu0 %v2351
        %v2765 = vpop.f32.mrf.mxu0
        %v2766 = vadd.f32 %v2653, %v2765
        %2767 = vmatmul.f32.gmra.mxu0 %v2355
        %v2768 = vpop.f32.mrf.mxu0
        %v2769 = vadd.f32 %v2656, %v2768
        %2770 = vmatmul.f32.gmra.mxu0 %v2359
        %v2771 = vpop.f32.mrf.mxu0
        %v2772 = vadd.f32 %v2659, %v2771
        %2773 = vmatmul.f32.gmra.mxu0 %v2363
        %v2774 = vpop.f32.mrf.mxu0
        %v2775 = vadd.f32 %v2662, %v2774
        %2776 = vmatmul.f32.gmra.mxu0 %v2367
        %v2777 = vpop.f32.mrf.mxu0
        %v2778 = vadd.f32 %v2665, %v2777
        %2779 = vmatmul.f32.gmra.mxu0 %v2371
        %v2780 = vpop.f32.mrf.mxu0
        %v2781 = vadd.f32 %v2668, %v2780
        %2782 = vmatmul.f32.gmra.mxu0 %v2375
        %v2783 = vpop.f32.mrf.mxu0
        %v2784 = vadd.f32 %v2671, %v2783
        %2785 = vmatmul.f32.gmra.mxu0 %v2379
        %v2786 = vpop.f32.mrf.mxu0
        %v2787 = vadd.f32 %v2674, %v2786
        %2788 = vmatmul.f32.gmra.mxu0 %v2383
        %v2789 = vpop.f32.mrf.mxu0
        %v2790 = vadd.f32 %v2677, %v2789
        %2791 = vmatmul.f32.gmra.mxu0 %v2387
        %v2792 = vpop.f32.mrf.mxu0
        %v2793 = vadd.f32 %v2680, %v2792
        %2794 = vmatmul.f32.gmra.mxu0 %v2391
        %v2795 = vpop.f32.mrf.mxu0
        %v2796 = vadd.f32 %v2683, %v2795
        %2797 = vmatmul.f32.gmra.mxu0 %v2395
        %v2798 = vpop.f32.mrf.mxu0
        %v2799 = vadd.f32 %v2686, %v2798
        %2800 = vmatmul.f32.gmra.mxu0 %v2399
        %v2801 = vpop.f32.mrf.mxu0
        %v2802 = vadd.f32 %v2689, %v2801
        %2803 = vdwg.mxu0
        %2804 = vmatpush.msra.mxu0 %v2464
        %2805 = vmatpush.msra.mxu0 %v2463
        %2806 = vmatpush.msra.mxu0 %v2462
        %2807 = vmatpush.msra.mxu0 %v2461
        %2808 = vmatpush.msra.mxu0 %v2460
        %2809 = vmatpush.msra.mxu0 %v2459
        %2810 = vmatpush.msra.mxu0 %v2458
        %2811 = vmatpush.msra.mxu0 %v2457
        %2812 = vmatpush.msra.mxu0 %v2456
        %2813 = vmatpush.msra.mxu0 %v2455
        %2814 = vmatpush.msra.mxu0 %v2454
        %2815 = vmatpush.msra.mxu0 %v2453
        %2816 = vmatpush.msra.mxu0 %v2452
        %2817 = vmatpush.msra.mxu0 %v2451
        %2818 = vmatpush.msra.mxu0 %v2450
        %2819 = vmatpush.msra.mxu0 %v2449
        %2820 = vmatmul.f32.gmra.mxu0 %v2276
        %v2821 = vpop.f32.mrf.mxu0
        %v2822 = vadd.f32 %v2709, %v2821
        %2823 = vmatmul.f32.gmra.mxu0 %v2280
        %v2824 = vpop.f32.mrf.mxu0
        %v2825 = vadd.f32 %v2712, %v2824
        %2826 = vmatmul.f32.gmra.mxu0 %v2284
        %v2827 = vpop.f32.mrf.mxu0
        %v2828 = vadd.f32 %v2715, %v2827
        %2829 = vmatmul.f32.gmra.mxu0 %v2288
        %v2830 = vpop.f32.mrf.mxu0
        %v2831 = vadd.f32 %v2718, %v2830
        %2832 = vmatmul.f32.gmra.mxu0 %v2292
        %v2833 = vpop.f32.mrf.mxu0
        %v2834 = vadd.f32 %v2721, %v2833
        %2835 = vmatmul.f32.gmra.mxu0 %v2296
        %v2836 = vpop.f32.mrf.mxu0
        %v2837 = vadd.f32 %v2724, %v2836
        %2838 = vmatmul.f32.gmra.mxu0 %v2300
        %v2839 = vpop.f32.mrf.mxu0
        %v2840 = vadd.f32 %v2727, %v2839
        %2841 = vmatmul.f32.gmra.mxu0 %v2304
        %v2842 = vpop.f32.mrf.mxu0
        %v2843 = vadd.f32 %v2730, %v2842
        %2844 = vmatmul.f32.gmra.mxu0 %v2308
        %v2845 = vpop.f32.mrf.mxu0
        %v2846 = vadd.f32 %v2733, %v2845
        %2847 = vmatmul.f32.gmra.mxu0 %v2312
        %v2848 = vpop.f32.mrf.mxu0
        %v2849 = vadd.f32 %v2736, %v2848
        %2850 = vmatmul.f32.gmra.mxu0 %v2316
        %v2851 = vpop.f32.mrf.mxu0
        %v2852 = vadd.f32 %v2739, %v2851
        %2853 = vmatmul.f32.gmra.mxu0 %v2320
        %v2854 = vpop.f32.mrf.mxu0
        %v2855 = vadd.f32 %v2742, %v2854
        %2856 = vmatmul.f32.gmra.mxu0 %v2324
        %v2857 = vpop.f32.mrf.mxu0
        %v2858 = vadd.f32 %v2745, %v2857
        %2859 = vmatmul.f32.gmra.mxu0 %v2328
        %v2860 = vpop.f32.mrf.mxu0
        %v2861 = vadd.f32 %v2748, %v2860
        %2862 = vmatmul.f32.gmra.mxu0 %v2332
        %v2863 = vpop.f32.mrf.mxu0
        %v2864 = vadd.f32 %v2751, %v2863
        %2865 = vmatmul.f32.gmra.mxu0 %v2336
        %v2866 = vpop.f32.mrf.mxu0
        %v2867 = vadd.f32 %v2754, %v2866
        %2868 = vmatmul.f32.gmra.mxu0 %v2340
        %v2869 = vpop.f32.mrf.mxu0
        %v2870 = vadd.f32 %v2757, %v2869
        %2871 = vmatmul.f32.gmra.mxu0 %v2344
        %v2872 = vpop.f32.mrf.mxu0
        %v2873 = vadd.f32 %v2760, %v2872
        %2874 = vmatmul.f32.gmra.mxu0 %v2348
        %v2875 = vpop.f32.mrf.mxu0
        %v2876 = vadd.f32 %v2763, %v2875
        %2877 = vmatmul.f32.gmra.mxu0 %v2352
        %v2878 = vpop.f32.mrf.mxu0
        %v2879 = vadd.f32 %v2766, %v2878
        %2880 = vmatmul.f32.gmra.mxu0 %v2356
        %v2881 = vpop.f32.mrf.mxu0
        %v2882 = vadd.f32 %v2769, %v2881
        %2883 = vmatmul.f32.gmra.mxu0 %v2360
        %v2884 = vpop.f32.mrf.mxu0
        %v2885 = vadd.f32 %v2772, %v2884
        %2886 = vmatmul.f32.gmra.mxu0 %v2364
        %v2887 = vpop.f32.mrf.mxu0
        %v2888 = vadd.f32 %v2775, %v2887
        %2889 = vmatmul.f32.gmra.mxu0 %v2368
        %v2890 = vpop.f32.mrf.mxu0
        %v2891 = vadd.f32 %v2778, %v2890
        %2892 = vmatmul.f32.gmra.mxu0 %v2372
        %v2893 = vpop.f32.mrf.mxu0
        %v2894 = vadd.f32 %v2781, %v2893
        %2895 = vmatmul.f32.gmra.mxu0 %v2376
        %v2896 = vpop.f32.mrf.mxu0
        %v2897 = vadd.f32 %v2784, %v2896
        %2898 = vmatmul.f32.gmra.mxu0 %v2380
        %v2899 = vpop.f32.mrf.mxu0
        %v2900 = vadd.f32 %v2787, %v2899
        %2901 = vmatmul.f32.gmra.mxu0 %v2384
        %v2902 = vpop.f32.mrf.mxu0
        %v2903 = vadd.f32 %v2790, %v2902
        %2904 = vmatmul.f32.gmra.mxu0 %v2388
        %v2905 = vpop.f32.mrf.mxu0
        %v2906 = vadd.f32 %v2793, %v2905
        %2907 = vmatmul.f32.gmra.mxu0 %v2392
        %v2908 = vpop.f32.mrf.mxu0
        %v2909 = vadd.f32 %v2796, %v2908
        %2910 = vmatmul.f32.gmra.mxu0 %v2396
        %v2911 = vpop.f32.mrf.mxu0
        %v2912 = vadd.f32 %v2799, %v2911
        %2913 = vmatmul.f32.gmra.mxu0 %v2400
        %v2914 = vpop.f32.mrf.mxu0
        %v2915 = vadd.f32 %v2802, %v2914
        %2916 = vdwg.mxu0
        %2917 = vxpose.xlu0.b32.start [1/16] %v2822, 128
        %2918 = vxpose.xlu0.b32.cont [2/16] %v2825, 128
        %2919 = vxpose.xlu0.b32.cont [3/16] %v2828, 128
        %2920 = vxpose.xlu0.b32.cont [4/16] %v2831, 128
        %2921 = vxpose.xlu0.b32.cont [5/16] %v2834, 128
        %2922 = vxpose.xlu0.b32.cont [6/16] %v2837, 128
        %2923 = vxpose.xlu0.b32.cont [7/16] %v2840, 128
        %2924 = vxpose.xlu0.b32.cont [8/16] %v2843, 128
        %2925 = vxpose.xlu0.b32.cont [9/16] %v2846, 128
        %2926 = vxpose.xlu0.b32.cont [10/16] %v2849, 128
        %2927 = vxpose.xlu0.b32.cont [11/16] %v2852, 128
        %2928 = vxpose.xlu0.b32.cont [12/16] %v2855, 128
        %2929 = vxpose.xlu0.b32.cont [13/16] %v2858, 128
        %2930 = vxpose.xlu0.b32.cont [14/16] %v2861, 128
        %2931 = vxpose.xlu0.b32.cont [15/16] %v2864, 128
        %2932 = vxpose.xlu0.b32.end [16/16] %v2867, 128
        %v2933 = vpop.trf.xlu0
        %v2934 = vpop.trf.xlu0
        %v2935 = vpop.trf.xlu0
        %v2936 = vpop.trf.xlu0
        %v2937 = vpop.trf.xlu0
        %v2938 = vpop.trf.xlu0
        %v2939 = vpop.trf.xlu0
        %v2940 = vpop.trf.xlu0
        %v2941 = vpop.trf.xlu0
        %v2942 = vpop.trf.xlu0
        %v2943 = vpop.trf.xlu0
        %v2944 = vpop.trf.xlu0
        %v2945 = vpop.trf.xlu0
        %v2946 = vpop.trf.xlu0
        %v2947 = vpop.trf.xlu0
        %v2948 = vpop.trf.xlu0
        %2949 = vxpose.xlu0.b32.start [1/16] %v2870, 128
        %2950 = vxpose.xlu0.b32.cont [2/16] %v2873, 128
        %2951 = vxpose.xlu0.b32.cont [3/16] %v2876, 128
        %2952 = vxpose.xlu0.b32.cont [4/16] %v2879, 128
        %2953 = vxpose.xlu0.b32.cont [5/16] %v2882, 128
        %2954 = vxpose.xlu0.b32.cont [6/16] %v2885, 128
        %2955 = vxpose.xlu0.b32.cont [7/16] %v2888, 128
        %2956 = vxpose.xlu0.b32.cont [8/16] %v2891, 128
        %2957 = vxpose.xlu0.b32.cont [9/16] %v2894, 128
        %2958 = vxpose.xlu0.b32.cont [10/16] %v2897, 128
        %2959 = vxpose.xlu0.b32.cont [11/16] %v2900, 128
        %2960 = vxpose.xlu0.b32.cont [12/16] %v2903, 128
        %2961 = vxpose.xlu0.b32.cont [13/16] %v2906, 128
        %2962 = vxpose.xlu0.b32.cont [14/16] %v2909, 128
        %2963 = vxpose.xlu0.b32.cont [15/16] %v2912, 128
        %2964 = vxpose.xlu0.b32.end [16/16] %v2915, 128
        %v2965 = vpop.trf.xlu0
        %v2966 = vpop.trf.xlu0
        %v2967 = vpop.trf.xlu0
        %v2968 = vpop.trf.xlu0
        %v2969 = vpop.trf.xlu0
        %v2970 = vpop.trf.xlu0
        %v2971 = vpop.trf.xlu0
        %v2972 = vpop.trf.xlu0
        %v2973 = vpop.trf.xlu0
        %v2974 = vpop.trf.xlu0
        %v2975 = vpop.trf.xlu0
        %v2976 = vpop.trf.xlu0
        %v2977 = vpop.trf.xlu0
        %v2978 = vpop.trf.xlu0
        %v2979 = vpop.trf.xlu0
        %v2980 = vpop.trf.xlu0
        %2981 = vst [vmem:[%s283] sm:$0xff] %v2933
        %2982 = vst [vmem:[%s283 + $0x8] sm:$0xff] %v2965
        %2983 = vst [vmem:[%s283 + $0x10] sm:$0xff] %v2934
        %2984 = vst [vmem:[%s283 + $0x18] sm:$0xff] %v2966
        %2985 = vst [vmem:[%s283 + $0x20] sm:$0xff] %v2935
        %2986 = vst [vmem:[%s283 + $0x28] sm:$0xff] %v2967
        %2987 = vst [vmem:[%s283 + $0x30] sm:$0xff] %v2936
        %2988 = vst [vmem:[%s283 + $0x38] sm:$0xff] %v2968
        %2989 = vst [vmem:[%s283 + $0x40] sm:$0xff] %v2937
        %2990 = vst [vmem:[%s283 + $0x48] sm:$0xff] %v2969
        %2991 = vst [vmem:[%s283 + $0x50] sm:$0xff] %v2938
        %2992 = vst [vmem:[%s283 + $0x58] sm:$0xff] %v2970
        %2993 = vst [vmem:[%s283 + $0x60] sm:$0xff] %v2939
        %2994 = vst [vmem:[%s283 + $0x68] sm:$0xff] %v2971
        %2995 = vst [vmem:[%s283 + $0x70] sm:$0xff] %v2940
        %2996 = vst [vmem:[%s283 + $0x78] sm:$0xff] %v2972
        %2997 = vst [vmem:[%s283 + $0x80] sm:$0xff] %v2941
        %2998 = vst [vmem:[%s283 + $0x88] sm:$0xff] %v2973
        %2999 = vst [vmem:[%s283 + $0x90] sm:$0xff] %v2942
        %3000 = vst [vmem:[%s283 + $0x98] sm:$0xff] %v2974
        %3001 = vst [vmem:[%s283 + $0xa0] sm:$0xff] %v2943
        %3002 = vst [vmem:[%s283 + $0xa8] sm:$0xff] %v2975
        %3003 = vst [vmem:[%s283 + $0xb0] sm:$0xff] %v2944
        %3004 = vst [vmem:[%s283 + $0xb8] sm:$0xff] %v2976
        %3005 = vst [vmem:[%s283 + $0xc0] sm:$0xff] %v2945
        %3006 = vst [vmem:[%s283 + $0xc8] sm:$0xff] %v2977
        %3007 = vst [vmem:[%s283 + $0xd0] sm:$0xff] %v2946
        %3008 = vst [vmem:[%s283 + $0xd8] sm:$0xff] %v2978
        %3009 = vst [vmem:[%s283 + $0xe0] sm:$0xff] %v2947
        %3010 = vst [vmem:[%s283 + $0xe8] sm:$0xff] %v2979
        %3011 = vst [vmem:[%s283 + $0xf0] sm:$0xff] %v2948
        %3012 = vst [vmem:[%s283 + $0xf8] sm:$0xff] %v2980
        %s3013 = sand.u32 %s136, 1
        %s3014 = scalar_lea.sflag [#allocation4], %s3013
        %s3015 = sand.u32 %s136, 1
        %s3016 = smul.addr %s3015, 256
        %s3017 = scalar_lea.vmem [#allocation10], %s3016
        // Predicated region
        $region53: #{tpu_custom_call.1} parent=35 // pred_check
          %p3018 = pneg %p146
        $region54: #{tpu_custom_call.1} parent=35 // pred_check_branch
          %3020 = sbr.rel (%p3018) target = $region56
        $region55: #{tpu_custom_call.1} parent=35 // pred_region
          %s3021 = smul.u32 2, %s28
          %3023 = vsyncadd %s3014, 0
          %s3024 = smul.addr %s27, 32
          %s3025 = sadd.s32 %s3021, %s3024
          %s3026 = smul.addr %s3025, 8
          %s3027 = scalar_lea.hbm %s4, %s3026
          %s3028 = sshll.u32 %s3017, 4
          %s3029 = int_to_ptr.vmem [resolvable:$true] %s3028
          %s3030 = sshll.u32 %s3027, 4
          %s3031 = int_to_ptr.hbm [resolvable:$true] %s3030
          %3036 = dma.vmem_to_hbm [thread:$0]  %s3029, 4096, %s3031, %s3014, 256, 256, 16
        $region56: #{tpu_custom_call.1} parent=35 // pred_fallthru
          _
      $region36: #{tpu_custom_call.1} parent=5 // pred_fallthru
        _
      %p3037 = scmp.le.s32.totalorder 2, %s18
      // Predicated region
      $region57: #{tpu_custom_call.1} parent=5 // pred_check
        %p3038 = pneg %p3037
      $region58: #{tpu_custom_call.1} parent=5 // pred_check_branch
        %3040 = sbr.rel (%p3038) target = $region60
      $region59: #{tpu_custom_call.1} parent=5 // pred_region
        %s3041 = ssub.s32 %s18, 2
        // Predicated region
        $region61: #{tpu_custom_call.1} parent=59 // pred_check
          %p3042 = pneg %p152
        $region62: #{tpu_custom_call.1} parent=59 // pred_check_branch
          %3044 = sbr.rel (%p3042) target = $region64
        $region63: #{tpu_custom_call.1} parent=59 // pred_region
          %s3045 = sand.u32 %s137, 1
          %s3046 = scalar_lea.sflag [#allocation4], %s3045
          %s3047 = sand.u32 %s137, 1
          %s3048 = smul.addr %s3047, 256
          %s3049 = scalar_lea.vmem [#allocation10], %s3048
          %3051 = dma.done %s3046, 4096
        $region64: #{tpu_custom_call.1} parent=59 // pred_fallthru
          _
      $region60: #{tpu_custom_call.1} parent=5 // pred_fallthru
        _
    $region6: #{tpu_custom_call.1} parent=1 // loop_footer
      %s22 = sadd.s32 1, %s18
    $region7: #{tpu_custom_call.1} parent=1 // loop_footer_branch
      %17 = sbr.rel target = $region3
    $region8: #{tpu_custom_call.1} parent=1 // loop_exit
      _
    %3052 = vsyncpa [#allocation3], 1
    %s3053 = scalar_lea.sflag [#allocation3], 1
    %3054 = vsyncpa %s3053, 1
    %3055 = vsyncpa [#allocation6], 1
    %3056 = vsyncpa [#allocation9], 1
    %3057 = vsyncpa [#allocation4], 1
    %s3058 = scalar_lea.sflag [#allocation4], 1
    %3059 = vsyncpa %s3058, 1

</llo_original>
